<compile_context>
chip_gen: v7x
topology: tpu7x:2x2x1
jax: 0.10.0
libtpu: 0.0.40
codegen_flags: <defaults>
</compile_context>

<pallas_src>
import functools
import math

import jax
import jax.numpy as jnp
from jax import lax
from jax.experimental import pallas as pl
from jax.experimental.pallas import tpu as pltpu


def _mha_kernel(q_ref, k_ref, v_ref,
                wq_ref, bq_ref, wk_ref, bk_ref, wv_ref, bv_ref,
                wm_ref, bm_ref,
                out_ref, *, num_heads, head_dim):
    # One grid step == one batch instance.  All tensors are (channels, N).
    H, hd = num_heads, head_dim
    D = H * hd
    N = out_ref.shape[-1]

    def proj(x_ref, w_ref, b_ref):
        # Conv1d(kernel_size=1): bf16 MXU operands, f32 accumulation + f32 bias.
        x = x_ref[0].astype(jnp.bfloat16)                        # (D, N)
        y = jnp.dot(w_ref[...], x, preferred_element_type=jnp.float32)
        return y + b_ref[...]                                     # (D, N) f32

    qp = proj(q_ref, wq_ref, bq_ref)   # 1/sqrt(hd) already folded into wq/bq
    kp = proj(k_ref, wk_ref, bk_ref)
    vp = proj(v_ref, wv_ref, bv_ref)

    # Head-contiguous rows -> (H, hd, N) reshape is layout-preserving (hd=16
    # is a multiple of both f32 and bf16 sublane tiles).
    qh = qp.astype(jnp.bfloat16).reshape(H, hd, N)
    kh = kp.astype(jnp.bfloat16).reshape(H, hd, N)
    vh = vp.astype(jnp.bfloat16).reshape(H, hd, N)

    # Transposed scores: sT[h, m, n] = sum_d kh[h, d, m] * qh[h, d, n].
    sT = lax.dot_general(kh, qh, (((1,), (1,)), ((0,), (0,))),
                         preferred_element_type=jnp.float32)      # (H, N, N)

    # Softmax over the key axis (axis=1); keep max/exp math in f32.
    sT = sT - jnp.max(sT, axis=1, keepdims=True)
    pT = jnp.exp(sT)
    inv = pl.reciprocal(jnp.sum(pT, axis=1, keepdims=True), approx=True)
    pT = pT * inv

    # oh[h, d, n] = sum_m vh[h, d, m] * pT[h, m, n]  -- plain NN batched matmul,
    # no transpose of the (N, N) probability matrix.
    oh = lax.dot_general(vh, pT.astype(jnp.bfloat16),
                         (((2,), (1,)), ((0,), (0,))),
                         preferred_element_type=jnp.float32)      # (H, hd, N)

    # Merge Conv1d directly on the register-resident result (no VMEM scratch).
    x = oh.reshape(D, N).astype(jnp.bfloat16)
    out = jnp.dot(wm_ref[...], x,
                  preferred_element_type=jnp.float32) + bm_ref[...]
    out_ref[0] = out.astype(out_ref.dtype)     # lane-dense (D, N) store


def multi_headed_attention(q, k, v, params, num_heads):
    """q, k, v: (B, d_model, N) float32.  Returns (B, d_model, N) float32."""
    B, D, N = q.shape
    assert D % num_heads == 0
    head_dim = D // num_heads
    (wq, bq), (wk, bk), (wv, bv), (wm, bm) = params

    # PyTorch's view(B, head_dim, H, N) interleaves heads across channels
    # (c = d*H + h).  Permute projection OUTPUT channels and merge INPUT
    # channels so head h owns contiguous rows [h*hd, (h+1)*hd) in the kernel
    # (exact re-parameterisation).
    idx = jnp.arange(D)
    perm = (idx % head_dim) * num_heads + (idx // head_dim)
    scale = 1.0 / math.sqrt(head_dim)

    # Weights as bf16 MXU operands (f32 accumulation in kernel); biases f32.
    wq_p = (wq[perm] * scale).astype(jnp.bfloat16)
    bq_p = (bq[perm] * scale).reshape(D, 1)
    wk_p = wk[perm].astype(jnp.bfloat16)
    bk_p = bk[perm].reshape(D, 1)
    wv_p = wv[perm].astype(jnp.bfloat16)
    bv_p = bv[perm].reshape(D, 1)
    wm_p = wm[:, perm].astype(jnp.bfloat16)
    bm_p = bm.reshape(D, 1)

    def full_spec(shape):
        return pl.BlockSpec(shape, lambda b: (0,) * len(shape))

    qkv_spec = pl.BlockSpec((1, D, N), lambda b: (b, 0, 0))

    kernel = functools.partial(_mha_kernel,
                               num_heads=num_heads, head_dim=head_dim)

    return pl.pallas_call(
        kernel,
        out_shape=jax.ShapeDtypeStruct((B, D, N), jnp.float32),
        grid_spec=pltpu.PrefetchScalarGridSpec(
            num_scalar_prefetch=0,
            grid=(B,),
            in_specs=[
                qkv_spec, qkv_spec, qkv_spec,
                full_spec(wq_p.shape), full_spec(bq_p.shape),
                full_spec(wk_p.shape), full_spec(bk_p.shape),
                full_spec(wv_p.shape), full_spec(bv_p.shape),
                full_spec(wm_p.shape), full_spec(bm_p.shape),
            ],
            out_specs=pl.BlockSpec((1, D, N), lambda b: (b, 0, 0)),
        ),
        compiler_params=pltpu.CompilerParams(
            dimension_semantics=("parallel",)),
    )(q, k, v, wq_p, bq_p, wk_p, bk_p, wv_p, bv_p, wm_p, bm_p)


def init_params(key, num_heads, d_model):
    """Synthetic Conv1d(d_model, d_model, k=1) weights: (Cout, Cin) + (Cout,)."""
    del num_heads
    params = []
    bound = 1.0 / math.sqrt(d_model)   # PyTorch Conv1d default init range
    for _ in range(4):                 # proj_q, proj_k, proj_v, merge
        key, kw, kb = jax.random.split(key, 3)
        w = jax.random.uniform(kw, (d_model, d_model), jnp.float32, -bound, bound)
        b = jax.random.uniform(kb, (d_model,), jnp.float32, -bound, bound)
        params.append((w, b))
    return params


def _reference(q, k, v, params, num_heads):
    """Pure-JAX f32 reference mirroring the PyTorch module exactly."""
    (wq, bq), (wk, bk), (wv, bv), (wm, bm) = params
    B, D, N = q.shape
    hd = D // num_heads

    def conv(x, w, b):
        return jnp.einsum('oi,bin->bon', w, x,
                          precision=lax.Precision.HIGHEST) + b[None, :, None]

    qp = conv(q, wq, bq).reshape(B, hd, num_heads, N)
    kp = conv(k, wk, bk).reshape(B, hd, num_heads, N)
    vp = conv(v, wv, bv).reshape(B, hd, num_heads, N)
    scores = jnp.einsum('bdhn,bdhm->bhnm', qp, kp,
                        precision=lax.Precision.HIGHEST) / math.sqrt(hd)
    prob = jax.nn.softmax(scores, axis=-1)
    x = jnp.einsum('bhnm,bdhm->bdhn', prob, vp,
                   precision=lax.Precision.HIGHEST)
    return conv(x.reshape(B, D, N), wm, bm)


if __name__ == "__main__":
    key = jax.random.PRNGKey(0)
    B, num_heads, d_model, N = 2, 4, 64, 128

    key, kq, kk, kv, kparam = jax.random.split(key, 5)
    q = jax.random.normal(kq, (B, d_model, N), jnp.float32)
    k = jax.random.normal(kk, (B, d_model, N), jnp.float32)
    v = jax.random.normal(kv, (B, d_model, N), jnp.float32)
    params = init_params(kparam, num_heads, d_model)

    out = multi_headed_attention(q, k, v, params, num_heads)
    out = jax.block_until_ready(out)

    ref = _reference(q, k, v, params, num_heads)
    assert out.shape == (B, d_model, N), out.shape
    max_err = float(jnp.max(jnp.abs(out - ref)))
    # bf16 MXU operands (f32 accumulation) + approx reciprocal: ~1e-3 max abs
    # error vs. the f32-HIGHEST reference, so use a bf16-appropriate tolerance.
    assert jnp.allclose(out, ref, atol=2e-2, rtol=2e-2), max_err

    print("KERNEL_OK")
</pallas_src>

<mosaic_0001>
module attributes {stable_mosaic.version = 11 : i64} {
  func.func @_mha_kernel(%arg0: i32, %arg1: memref<1x64x128xf32, #tpu.memory_space<vmem>>, %arg2: memref<1x64x128xf32, #tpu.memory_space<vmem>>, %arg3: memref<1x64x128xf32, #tpu.memory_space<vmem>>, %arg4: memref<64x64xbf16, #tpu.memory_space<vmem>>, %arg5: memref<64x1xf32, #tpu.memory_space<vmem>>, %arg6: memref<64x64xbf16, #tpu.memory_space<vmem>>, %arg7: memref<64x1xf32, #tpu.memory_space<vmem>>, %arg8: memref<64x64xbf16, #tpu.memory_space<vmem>>, %arg9: memref<64x1xf32, #tpu.memory_space<vmem>>, %arg10: memref<64x64xbf16, #tpu.memory_space<vmem>>, %arg11: memref<64x1xf32, #tpu.memory_space<vmem>>, %arg12: memref<1x64x128xf32, #tpu.memory_space<vmem>>) attributes {dimension_semantics = [#tpu.dimension_semantics<parallel>], iteration_bounds = array<i64: 2>, scalar_prefetch = 0 : i64, scratch_operands = 0 : i64, tpu.core_type = #tpu.core_type<tc>, window_params = [{transform_indices = @transform_0, window_bounds = array<i64: 1, 64, 128>}, {transform_indices = @transform_1, window_bounds = array<i64: 1, 64, 128>}, {transform_indices = @transform_2, window_bounds = array<i64: 1, 64, 128>}, {pipeline_mode = #tpu.pipeline_mode<synchronous>, transform_indices = @transform_3, window_bounds = array<i64: 64, 64>}, {pipeline_mode = #tpu.pipeline_mode<synchronous>, transform_indices = @transform_4, window_bounds = array<i64: 64, 1>}, {pipeline_mode = #tpu.pipeline_mode<synchronous>, transform_indices = @transform_5, window_bounds = array<i64: 64, 64>}, {pipeline_mode = #tpu.pipeline_mode<synchronous>, transform_indices = @transform_6, window_bounds = array<i64: 64, 1>}, {pipeline_mode = #tpu.pipeline_mode<synchronous>, transform_indices = @transform_7, window_bounds = array<i64: 64, 64>}, {pipeline_mode = #tpu.pipeline_mode<synchronous>, transform_indices = @transform_8, window_bounds = array<i64: 64, 1>}, {pipeline_mode = #tpu.pipeline_mode<synchronous>, transform_indices = @transform_9, window_bounds = array<i64: 64, 64>}, {pipeline_mode = #tpu.pipeline_mode<synchronous>, transform_indices = @transform_10, window_bounds = array<i64: 64, 1>}, {transform_indices = @transform_11, window_bounds = array<i64: 1, 64, 128>}]} {
    %c0 = arith.constant 0 : index
    %c0_0 = arith.constant 0 : index
    %c0_1 = arith.constant 0 : index
    %0 = vector.load %arg1[%c0, %c0_0, %c0_1] : memref<1x64x128xf32, #tpu.memory_space<vmem>>, vector<1x64x128xf32>
    %1 = vector.shape_cast %0 : vector<1x64x128xf32> to vector<64x128xf32>
    %2 = arith.truncf %1 : vector<64x128xf32> to vector<64x128xbf16>
    %c0_2 = arith.constant 0 : index
    %c0_3 = arith.constant 0 : index
    %3 = vector.load %arg4[%c0_2, %c0_3] : memref<64x64xbf16, #tpu.memory_space<vmem>>, vector<64x64xbf16>
    %cst = arith.constant dense<0.000000e+00> : vector<64x128xf32>
    %4 = tpu.matmul %3, %2, %cst {dimension_numbers = #tpu.dot_dimension_numbers<[1], [0], [0], [1], [0, 0, 1, 1], [], []>} : vector<64x64xbf16>, vector<64x128xbf16>, vector<64x128xf32> -> vector<64x128xf32>
    %c0_4 = arith.constant 0 : index
    %c0_5 = arith.constant 0 : index
    %5 = vector.load %arg5[%c0_4, %c0_5] : memref<64x1xf32, #tpu.memory_space<vmem>>, vector<64x1xf32>
    %6 = vector.broadcast %5 : vector<64x1xf32> to vector<64x128xf32>
    %7 = arith.addf %4, %6 : vector<64x128xf32>
    %c0_6 = arith.constant 0 : index
    %c0_7 = arith.constant 0 : index
    %c0_8 = arith.constant 0 : index
    %8 = vector.load %arg2[%c0_6, %c0_7, %c0_8] : memref<1x64x128xf32, #tpu.memory_space<vmem>>, vector<1x64x128xf32>
    %9 = vector.shape_cast %8 : vector<1x64x128xf32> to vector<64x128xf32>
    %10 = arith.truncf %9 : vector<64x128xf32> to vector<64x128xbf16>
    %c0_9 = arith.constant 0 : index
    %c0_10 = arith.constant 0 : index
    %11 = vector.load %arg6[%c0_9, %c0_10] : memref<64x64xbf16, #tpu.memory_space<vmem>>, vector<64x64xbf16>
    %cst_11 = arith.constant dense<0.000000e+00> : vector<64x128xf32>
    %12 = tpu.matmul %11, %10, %cst_11 {dimension_numbers = #tpu.dot_dimension_numbers<[1], [0], [0], [1], [0, 0, 1, 1], [], []>} : vector<64x64xbf16>, vector<64x128xbf16>, vector<64x128xf32> -> vector<64x128xf32>
    %c0_12 = arith.constant 0 : index
    %c0_13 = arith.constant 0 : index
    %13 = vector.load %arg7[%c0_12, %c0_13] : memref<64x1xf32, #tpu.memory_space<vmem>>, vector<64x1xf32>
    %14 = vector.broadcast %13 : vector<64x1xf32> to vector<64x128xf32>
    %15 = arith.addf %12, %14 : vector<64x128xf32>
    %c0_14 = arith.constant 0 : index
    %c0_15 = arith.constant 0 : index
    %c0_16 = arith.constant 0 : index
    %16 = vector.load %arg3[%c0_14, %c0_15, %c0_16] : memref<1x64x128xf32, #tpu.memory_space<vmem>>, vector<1x64x128xf32>
    %17 = vector.shape_cast %16 : vector<1x64x128xf32> to vector<64x128xf32>
    %18 = arith.truncf %17 : vector<64x128xf32> to vector<64x128xbf16>
    %c0_17 = arith.constant 0 : index
    %c0_18 = arith.constant 0 : index
    %19 = vector.load %arg8[%c0_17, %c0_18] : memref<64x64xbf16, #tpu.memory_space<vmem>>, vector<64x64xbf16>
    %cst_19 = arith.constant dense<0.000000e+00> : vector<64x128xf32>
    %20 = tpu.matmul %19, %18, %cst_19 {dimension_numbers = #tpu.dot_dimension_numbers<[1], [0], [0], [1], [0, 0, 1, 1], [], []>} : vector<64x64xbf16>, vector<64x128xbf16>, vector<64x128xf32> -> vector<64x128xf32>
    %c0_20 = arith.constant 0 : index
    %c0_21 = arith.constant 0 : index
    %21 = vector.load %arg9[%c0_20, %c0_21] : memref<64x1xf32, #tpu.memory_space<vmem>>, vector<64x1xf32>
    %22 = vector.broadcast %21 : vector<64x1xf32> to vector<64x128xf32>
    %23 = arith.addf %20, %22 : vector<64x128xf32>
    %24 = arith.truncf %7 : vector<64x128xf32> to vector<64x128xbf16>
    %25 = vector.shape_cast %24 : vector<64x128xbf16> to vector<4x16x128xbf16>
    %26 = arith.truncf %15 : vector<64x128xf32> to vector<64x128xbf16>
    %27 = vector.shape_cast %26 : vector<64x128xbf16> to vector<4x16x128xbf16>
    %28 = arith.truncf %23 : vector<64x128xf32> to vector<64x128xbf16>
    %29 = vector.shape_cast %28 : vector<64x128xbf16> to vector<4x16x128xbf16>
    %cst_22 = arith.constant dense<0.000000e+00> : vector<4x128x128xf32>
    %30 = tpu.matmul %27, %25, %cst_22 {dimension_numbers = #tpu.dot_dimension_numbers<[1], [1], [2], [2], [0, 0, 0, 2, 1, 2], [0], [0]>} : vector<4x16x128xbf16>, vector<4x16x128xbf16>, vector<4x128x128xf32> -> vector<4x128x128xf32>
    %cst_23 = arith.constant dense<0xFF800000> : vector<4x128xf32>
    %31 = vector.multi_reduction <maximumf>, %30, %cst_23 [1] : vector<4x128x128xf32> to vector<4x128xf32>
    %32 = vector.shape_cast %31 : vector<4x128xf32> to vector<4x1x128xf32>
    %33 = vector.broadcast %32 : vector<4x1x128xf32> to vector<4x128x128xf32>
    %34 = arith.subf %30, %33 : vector<4x128x128xf32>
    %35 = math.exp %34 : vector<4x128x128xf32>
    %cst_24 = arith.constant dense<0.000000e+00> : vector<4x128xf32>
    %36 = vector.multi_reduction <add>, %35, %cst_24 [1] : vector<4x128x128xf32> to vector<4x128xf32>
    %37 = vector.shape_cast %36 : vector<4x128xf32> to vector<4x1x128xf32>
    %38 = tpu.reciprocal %37 {approx = true} : vector<4x1x128xf32> -> vector<4x1x128xf32>
    %39 = vector.broadcast %38 : vector<4x1x128xf32> to vector<4x128x128xf32>
    %40 = arith.mulf %35, %39 : vector<4x128x128xf32>
    %41 = arith.truncf %40 : vector<4x128x128xf32> to vector<4x128x128xbf16>
    %cst_25 = arith.constant dense<0.000000e+00> : vector<4x16x128xf32>
    %42 = tpu.matmul %29, %41, %cst_25 {dimension_numbers = #tpu.dot_dimension_numbers<[2], [1], [1], [2], [0, 0, 0, 1, 1, 2], [0], [0]>} : vector<4x16x128xbf16>, vector<4x128x128xbf16>, vector<4x16x128xf32> -> vector<4x16x128xf32>
    %43 = vector.shape_cast %42 : vector<4x16x128xf32> to vector<64x128xf32>
    %44 = arith.truncf %43 : vector<64x128xf32> to vector<64x128xbf16>
    %c0_26 = arith.constant 0 : index
    %c0_27 = arith.constant 0 : index
    %45 = vector.load %arg10[%c0_26, %c0_27] : memref<64x64xbf16, #tpu.memory_space<vmem>>, vector<64x64xbf16>
    %cst_28 = arith.constant dense<0.000000e+00> : vector<64x128xf32>
    %46 = tpu.matmul %45, %44, %cst_28 {dimension_numbers = #tpu.dot_dimension_numbers<[1], [0], [0], [1], [0, 0, 1, 1], [], []>} : vector<64x64xbf16>, vector<64x128xbf16>, vector<64x128xf32> -> vector<64x128xf32>
    %c0_29 = arith.constant 0 : index
    %c0_30 = arith.constant 0 : index
    %47 = vector.load %arg11[%c0_29, %c0_30] : memref<64x1xf32, #tpu.memory_space<vmem>>, vector<64x1xf32>
    %48 = vector.broadcast %47 : vector<64x1xf32> to vector<64x128xf32>
    %49 = arith.addf %46, %48 : vector<64x128xf32>
    %c0_31 = arith.constant 0 : index
    %c0_32 = arith.constant 0 : index
    %c0_33 = arith.constant 0 : index
    %50 = vector.load %arg12[%c0_31, %c0_32, %c0_33] : memref<1x64x128xf32, #tpu.memory_space<vmem>>, vector<1x64x128xf32>
    %51 = vector.shape_cast %50 : vector<1x64x128xf32> to vector<64x128xf32>
    %52 = vector.shape_cast %49 : vector<64x128xf32> to vector<1x64x128xf32>
    tpu.vector_store %arg12[%c0_31, %c0_32, %c0_33], %52 {strides = array<i32>} : memref<1x64x128xf32, #tpu.memory_space<vmem>>, vector<1x64x128xf32>,
    return
  }
  func.func @transform_0(%arg0: i32) -> (i32, i32, i32) {
    %c0_i32 = arith.constant 0 : i32
    %c0_i32_0 = arith.constant 0 : i32
    %c0_i32_1 = arith.constant 0 : i32
    return %arg0, %c0_i32, %c0_i32_0 : i32, i32, i32
  }
  func.func @transform_1(%arg0: i32) -> (i32, i32, i32) {
    %c0_i32 = arith.constant 0 : i32
    %c0_i32_0 = arith.constant 0 : i32
    %c0_i32_1 = arith.constant 0 : i32
    return %arg0, %c0_i32, %c0_i32_0 : i32, i32, i32
  }
  func.func @transform_2(%arg0: i32) -> (i32, i32, i32) {
    %c0_i32 = arith.constant 0 : i32
    %c0_i32_0 = arith.constant 0 : i32
    %c0_i32_1 = arith.constant 0 : i32
    return %arg0, %c0_i32, %c0_i32_0 : i32, i32, i32
  }
  func.func @transform_3(%arg0: i32) -> (i32, i32) {
    %c0_i32 = arith.constant 0 : i32
    %c0_i32_0 = arith.constant 0 : i32
    %c0_i32_1 = arith.constant 0 : i32
    return %c0_i32, %c0_i32_0 : i32, i32
  }
  func.func @transform_4(%arg0: i32) -> (i32, i32) {
    %c0_i32 = arith.constant 0 : i32
    %c0_i32_0 = arith.constant 0 : i32
    %c0_i32_1 = arith.constant 0 : i32
    return %c0_i32, %c0_i32_0 : i32, i32
  }
  func.func @transform_5(%arg0: i32) -> (i32, i32) {
    %c0_i32 = arith.constant 0 : i32
    %c0_i32_0 = arith.constant 0 : i32
    %c0_i32_1 = arith.constant 0 : i32
    return %c0_i32, %c0_i32_0 : i32, i32
  }
  func.func @transform_6(%arg0: i32) -> (i32, i32) {
    %c0_i32 = arith.constant 0 : i32
    %c0_i32_0 = arith.constant 0 : i32
    %c0_i32_1 = arith.constant 0 : i32
    return %c0_i32, %c0_i32_0 : i32, i32
  }
  func.func @transform_7(%arg0: i32) -> (i32, i32) {
    %c0_i32 = arith.constant 0 : i32
    %c0_i32_0 = arith.constant 0 : i32
    %c0_i32_1 = arith.constant 0 : i32
    return %c0_i32, %c0_i32_0 : i32, i32
  }
  func.func @transform_8(%arg0: i32) -> (i32, i32) {
    %c0_i32 = arith.constant 0 : i32
    %c0_i32_0 = arith.constant 0 : i32
    %c0_i32_1 = arith.constant 0 : i32
    return %c0_i32, %c0_i32_0 : i32, i32
  }
  func.func @transform_9(%arg0: i32) -> (i32, i32) {
    %c0_i32 = arith.constant 0 : i32
    %c0_i32_0 = arith.constant 0 : i32
    %c0_i32_1 = arith.constant 0 : i32
    return %c0_i32, %c0_i32_0 : i32, i32
  }
  func.func @transform_10(%arg0: i32) -> (i32, i32) {
    %c0_i32 = arith.constant 0 : i32
    %c0_i32_0 = arith.constant 0 : i32
    %c0_i32_1 = arith.constant 0 : i32
    return %c0_i32, %c0_i32_0 : i32, i32
  }
  func.func @transform_11(%arg0: i32) -> (i32, i32, i32) {
    %c0_i32 = arith.constant 0 : i32
    %c0_i32_0 = arith.constant 0 : i32
    %c0_i32_1 = arith.constant 0 : i32
    return %arg0, %c0_i32, %c0_i32_0 : i32, i32, i32
  }
}

</mosaic_0001>

<llo_original>
// kernel: tpu_custom_call.1
$region0: #{tpu_custom_call.1}
  #allocation0 [shape = 'u32[]', space=smem, size = 0x4, offset = 0x4, fixed_abs, tag = 'smem constant byte address 0x4 - core index']
  #allocation1 [shape = 'u32[144,128]{1,0:T(1,128)}', space=vmem, size = 0x12000, scoped, tag = 'internal scratch']
  %s0 = inlined_call_operand.vmem [shape: f32[2,64,128], index: 0, kind: input, shape index: {}]
  %s1 = inlined_call_operand.vmem [shape: f32[2,64,128], index: 1, kind: input, shape index: {}]
  %s2 = inlined_call_operand.hbm [shape: f32[2,64,128], index: 2, kind: input, shape index: {}]
  %s3 = inlined_call_operand.hbm [shape: bf16[64,64], index: 3, kind: input, shape index: {}]
  %s4 = inlined_call_operand.vmem [shape: f32[64,1], index: 4, kind: input, shape index: {}]
  %s5 = inlined_call_operand.hbm [shape: bf16[64,64], index: 5, kind: input, shape index: {}]
  %s6 = inlined_call_operand.vmem [shape: f32[64,1], index: 6, kind: input, shape index: {}]
  %s7 = inlined_call_operand.hbm [shape: bf16[64,64], index: 7, kind: input, shape index: {}]
  %s8 = inlined_call_operand.vmem [shape: f32[64,1], index: 8, kind: input, shape index: {}]
  %s9 = inlined_call_operand.vmem [shape: bf16[64,64], index: 9, kind: input, shape index: {}]
  %s10 = inlined_call_operand.vmem [shape: f32[64,1], index: 10, kind: input, shape index: {}]
  %s11 = inlined_call_operand.hbm [shape: f32[2,64,128], index: 11, kind: output, shape index: {}]
  %s12 = sld [smem:[#allocation0]]
  $region93: #{tpu_custom_call.1} parent=0
    _
  %s14 = ssub.s32 1, %s12
  %s15 = scalar_select 0, %s14, %s12
  $region1: #{tpu_custom_call.1} parent=0
    #allocation2 [shape = 'u8[65536]{0}', space=vmem, size = 0x10000, scoped, tag = 'input window, operand 2']
    #allocation3 [shape = 's32[2]{0}', space=sflag, size = 0x8, scoped, tag = 'scoped memory for tpu_custom_call.1']
    #allocation4 [shape = 's32[2]{0}', space=sflag, size = 0x8, scoped, tag = 'scoped memory for tpu_custom_call.1']
    #allocation5 [shape = 'u8[16384]{0}', space=vmem, size = 0x4000, scoped, tag = 'input window, operand 3, single buffered']
    #allocation6 [shape = 's32[1]{0}', space=sflag, size = 0x4, scoped, tag = 'scoped memory for tpu_custom_call.1']
    #allocation7 [shape = 'u8[16384]{0}', space=vmem, size = 0x4000, scoped, tag = 'input window, operand 5, single buffered']
    #allocation8 [shape = 'u8[16384]{0}', space=vmem, size = 0x4000, scoped, tag = 'input window, operand 7, single buffered']
    #allocation9 [shape = 's32[1]{0}', space=sflag, size = 0x4, scoped, tag = 'scoped memory for tpu_custom_call.1']
    #allocation10 [shape = 'u8[65536]{0}', space=vmem, size = 0x10000, scoped, tag = 'output window, operand 0']
    %16 = vsyncpa [#allocation3], 0
    %s17 = scalar_lea.sflag [#allocation3], 1
    %18 = vsyncpa %s17, 0
    %19 = vsyncpa [#allocation6], 0
    %20 = vsyncpa [#allocation9], 0
    %21 = vsyncpa [#allocation4], 0
    %s22 = scalar_lea.sflag [#allocation4], 1
    %23 = vsyncpa %s22, 0
    loop: start=0, step=1, limit=4
    $region2: #{tpu_custom_call.1} parent=1 // loop_pre_header
      _
    $region3: #{tpu_custom_call.1} parent=1 // loop_header
      %s25 = sphi 0, %s29
      %p26 = scmp.ge.s32.totalorder %s25, 4
      %s35 = sphi 0, %s37
      %s38 = sphi 0, %s35
      %s39 = sphi 0, %s38
      %s55 = sphi 0, %s39
      %s61 = sphi 0, %s63
      %s64 = sphi 0, %s61
      %s65 = sphi 0, %s64
      %s81 = sphi 0, %s65
      %s87 = sphi 0, %s89
      %s90 = sphi 0, %s87
      %s91 = sphi 0, %s90
      %s107 = sphi 0, %s91
      %s111 = sphi 0, %s111
      %s113 = sphi 0, %s111
      %s114 = sphi 0, %s113
      %s128 = sphi 0, %s114
      %s132 = sphi 0, %s132
      %s134 = sphi 0, %s132
      %s135 = sphi 0, %s134
      %s149 = sphi 0, %s135
      %s153 = sphi 0, %s153
      %s155 = sphi 0, %s153
      %s156 = sphi 0, %s155
      %s170 = sphi 0, %s156
      %s174 = sphi 0, %s174
      %s176 = sphi 0, %s174
      %s177 = sphi 0, %s176
      %s191 = sphi 0, %s177
      %s195 = sphi 0, %s195
      %s197 = sphi 0, %s195
      %s198 = sphi 0, %s197
      %s212 = sphi 0, %s198
      %s216 = sphi 0, %s216
      %s218 = sphi 0, %s216
      %s219 = sphi 0, %s218
      %s233 = sphi 0, %s219
      %s237 = sphi 0, %s237
      %s239 = sphi 0, %s237
      %s240 = sphi 0, %s239
      %s254 = sphi 0, %s240
      %s258 = sphi 0, %s258
      %s260 = sphi 0, %s258
      %s261 = sphi 0, %s260
      %s275 = sphi 0, %s261
      %s281 = sphi 0, %s283
      %s284 = sphi 0, %s281
      %s285 = sphi 0, %s284
      %s301 = sphi 0, %s285
    $region4: #{tpu_custom_call.1} parent=1 // loop_header_branch
      %28 = sbr.rel (%p26) target = $region8
    $region5: #{tpu_custom_call.1} parent=1 // loop_body
      %s30 = ssub.s32 %s25, 1
      %s31 = ssub.s32 %s25, 2
      %s32 = sadd.s32 %s25, 1
      %s33 = ssub.s32 %s25, %s32
      %p34 = scmp.eq.s32.totalorder %s33, 0
      %s36 = sadd.s32 %s35, 1
      %s37 = scalar_select %p34, %s35, %s36
      %p40 = pneg %p34
      %p41 = scmp.eq.s32.totalorder %s25, 1
      %p42 = por %p40, %p41
      %p43 = scmp.ne.s32.totalorder %s35, %s38
      %p44 = scmp.eq.s32.totalorder %s25, 0
      %p45 = por %p43, %p44
      %p46 = scmp.ne.s32.totalorder %s35, %s38
      %p47 = scmp.eq.s32.totalorder %s30, 1
      %p48 = por %p46, %p47
      %p49 = scmp.ne.s32.totalorder %s38, %s39
      %p50 = scmp.eq.s32.totalorder %s30, 0
      %p51 = por %p49, %p50
      %p52 = scmp.ne.s32.totalorder %s38, %s39
      %p53 = scmp.eq.s32.totalorder %s31, 1
      %p54 = por %p52, %p53
      %p56 = scmp.ne.s32.totalorder %s39, %s55
      %p57 = scmp.eq.s32.totalorder %s31, 0
      %p58 = por %p56, %p57
      %s59 = ssub.s32 %s25, %s32
      %p60 = scmp.eq.s32.totalorder %s59, 0
      %s62 = sadd.s32 %s61, 1
      %s63 = scalar_select %p60, %s61, %s62
      %p66 = pneg %p60
      %p67 = scmp.eq.s32.totalorder %s25, 1
      %p68 = por %p66, %p67
      %p69 = scmp.ne.s32.totalorder %s61, %s64
      %p70 = scmp.eq.s32.totalorder %s25, 0
      %p71 = por %p69, %p70
      %p72 = scmp.ne.s32.totalorder %s61, %s64
      %p73 = scmp.eq.s32.totalorder %s30, 1
      %p74 = por %p72, %p73
      %p75 = scmp.ne.s32.totalorder %s64, %s65
      %p76 = scmp.eq.s32.totalorder %s30, 0
      %p77 = por %p75, %p76
      %p78 = scmp.ne.s32.totalorder %s64, %s65
      %p79 = scmp.eq.s32.totalorder %s31, 1
      %p80 = por %p78, %p79
      %p82 = scmp.ne.s32.totalorder %s65, %s81
      %p83 = scmp.eq.s32.totalorder %s31, 0
      %p84 = por %p82, %p83
      %s85 = ssub.s32 %s25, %s32
      %p86 = scmp.eq.s32.totalorder %s85, 0
      %s88 = sadd.s32 %s87, 1
      %s89 = scalar_select %p86, %s87, %s88
      %p92 = pneg %p86
      %p93 = scmp.eq.s32.totalorder %s25, 1
      %p94 = por %p92, %p93
      %p95 = scmp.ne.s32.totalorder %s87, %s90
      %p96 = scmp.eq.s32.totalorder %s25, 0
      %p97 = por %p95, %p96
      %p98 = scmp.ne.s32.totalorder %s87, %s90
      %p99 = scmp.eq.s32.totalorder %s30, 1
      %p100 = por %p98, %p99
      %p101 = scmp.ne.s32.totalorder %s90, %s91
      %p102 = scmp.eq.s32.totalorder %s30, 0
      %p103 = por %p101, %p102
      %p104 = scmp.ne.s32.totalorder %s90, %s91
      %p105 = scmp.eq.s32.totalorder %s31, 1
      %p106 = por %p104, %p105
      %p108 = scmp.ne.s32.totalorder %s91, %s107
      %p109 = scmp.eq.s32.totalorder %s31, 0
      %p110 = por %p108, %p109
      %s112 = sadd.s32 %s111, 1
      %p115 = scmp.eq.s32.totalorder %s25, 1
      %p116 = scmp.ne.s32.totalorder %s111, %s113
      %p117 = scmp.eq.s32.totalorder %s25, 0
      %p118 = por %p116, %p117
      %p119 = scmp.ne.s32.totalorder %s111, %s113
      %p120 = scmp.eq.s32.totalorder %s30, 1
      %p121 = por %p119, %p120
      %p122 = scmp.ne.s32.totalorder %s113, %s114
      %p123 = scmp.eq.s32.totalorder %s30, 0
      %p124 = por %p122, %p123
      %p125 = scmp.ne.s32.totalorder %s113, %s114
      %p126 = scmp.eq.s32.totalorder %s31, 1
      %p127 = por %p125, %p126
      %p129 = scmp.ne.s32.totalorder %s114, %s128
      %p130 = scmp.eq.s32.totalorder %s31, 0
      %p131 = por %p129, %p130
      %s133 = sadd.s32 %s132, 1
      %p136 = scmp.eq.s32.totalorder %s25, 1
      %p137 = scmp.ne.s32.totalorder %s132, %s134
      %p138 = scmp.eq.s32.totalorder %s25, 0
      %p139 = por %p137, %p138
      %p140 = scmp.ne.s32.totalorder %s132, %s134
      %p141 = scmp.eq.s32.totalorder %s30, 1
      %p142 = por %p140, %p141
      %p143 = scmp.ne.s32.totalorder %s134, %s135
      %p144 = scmp.eq.s32.totalorder %s30, 0
      %p145 = por %p143, %p144
      %p146 = scmp.ne.s32.totalorder %s134, %s135
      %p147 = scmp.eq.s32.totalorder %s31, 1
      %p148 = por %p146, %p147
      %p150 = scmp.ne.s32.totalorder %s135, %s149
      %p151 = scmp.eq.s32.totalorder %s31, 0
      %p152 = por %p150, %p151
      %s154 = sadd.s32 %s153, 1
      %p157 = scmp.eq.s32.totalorder %s25, 1
      %p158 = scmp.ne.s32.totalorder %s153, %s155
      %p159 = scmp.eq.s32.totalorder %s25, 0
      %p160 = por %p158, %p159
      %p161 = scmp.ne.s32.totalorder %s153, %s155
      %p162 = scmp.eq.s32.totalorder %s30, 1
      %p163 = por %p161, %p162
      %p164 = scmp.ne.s32.totalorder %s155, %s156
      %p165 = scmp.eq.s32.totalorder %s30, 0
      %p166 = por %p164, %p165
      %p167 = scmp.ne.s32.totalorder %s155, %s156
      %p168 = scmp.eq.s32.totalorder %s31, 1
      %p169 = por %p167, %p168
      %p171 = scmp.ne.s32.totalorder %s156, %s170
      %p172 = scmp.eq.s32.totalorder %s31, 0
      %p173 = por %p171, %p172
      %s175 = sadd.s32 %s174, 1
      %p178 = scmp.eq.s32.totalorder %s25, 1
      %p179 = scmp.ne.s32.totalorder %s174, %s176
      %p180 = scmp.eq.s32.totalorder %s25, 0
      %p181 = por %p179, %p180
      %p182 = scmp.ne.s32.totalorder %s174, %s176
      %p183 = scmp.eq.s32.totalorder %s30, 1
      %p184 = por %p182, %p183
      %p185 = scmp.ne.s32.totalorder %s176, %s177
      %p186 = scmp.eq.s32.totalorder %s30, 0
      %p187 = por %p185, %p186
      %p188 = scmp.ne.s32.totalorder %s176, %s177
      %p189 = scmp.eq.s32.totalorder %s31, 1
      %p190 = por %p188, %p189
      %p192 = scmp.ne.s32.totalorder %s177, %s191
      %p193 = scmp.eq.s32.totalorder %s31, 0
      %p194 = por %p192, %p193
      %s196 = sadd.s32 %s195, 1
      %p199 = scmp.eq.s32.totalorder %s25, 1
      %p200 = scmp.ne.s32.totalorder %s195, %s197
      %p201 = scmp.eq.s32.totalorder %s25, 0
      %p202 = por %p200, %p201
      %p203 = scmp.ne.s32.totalorder %s195, %s197
      %p204 = scmp.eq.s32.totalorder %s30, 1
      %p205 = por %p203, %p204
      %p206 = scmp.ne.s32.totalorder %s197, %s198
      %p207 = scmp.eq.s32.totalorder %s30, 0
      %p208 = por %p206, %p207
      %p209 = scmp.ne.s32.totalorder %s197, %s198
      %p210 = scmp.eq.s32.totalorder %s31, 1
      %p211 = por %p209, %p210
      %p213 = scmp.ne.s32.totalorder %s198, %s212
      %p214 = scmp.eq.s32.totalorder %s31, 0
      %p215 = por %p213, %p214
      %s217 = sadd.s32 %s216, 1
      %p220 = scmp.eq.s32.totalorder %s25, 1
      %p221 = scmp.ne.s32.totalorder %s216, %s218
      %p222 = scmp.eq.s32.totalorder %s25, 0
      %p223 = por %p221, %p222
      %p224 = scmp.ne.s32.totalorder %s216, %s218
      %p225 = scmp.eq.s32.totalorder %s30, 1
      %p226 = por %p224, %p225
      %p227 = scmp.ne.s32.totalorder %s218, %s219
      %p228 = scmp.eq.s32.totalorder %s30, 0
      %p229 = por %p227, %p228
      %p230 = scmp.ne.s32.totalorder %s218, %s219
      %p231 = scmp.eq.s32.totalorder %s31, 1
      %p232 = por %p230, %p231
      %p234 = scmp.ne.s32.totalorder %s219, %s233
      %p235 = scmp.eq.s32.totalorder %s31, 0
      %p236 = por %p234, %p235
      %s238 = sadd.s32 %s237, 1
      %p241 = scmp.eq.s32.totalorder %s25, 1
      %p242 = scmp.ne.s32.totalorder %s237, %s239
      %p243 = scmp.eq.s32.totalorder %s25, 0
      %p244 = por %p242, %p243
      %p245 = scmp.ne.s32.totalorder %s237, %s239
      %p246 = scmp.eq.s32.totalorder %s30, 1
      %p247 = por %p245, %p246
      %p248 = scmp.ne.s32.totalorder %s239, %s240
      %p249 = scmp.eq.s32.totalorder %s30, 0
      %p250 = por %p248, %p249
      %p251 = scmp.ne.s32.totalorder %s239, %s240
      %p252 = scmp.eq.s32.totalorder %s31, 1
      %p253 = por %p251, %p252
      %p255 = scmp.ne.s32.totalorder %s240, %s254
      %p256 = scmp.eq.s32.totalorder %s31, 0
      %p257 = por %p255, %p256
      %s259 = sadd.s32 %s258, 1
      %p262 = scmp.eq.s32.totalorder %s25, 1
      %p263 = scmp.ne.s32.totalorder %s258, %s260
      %p264 = scmp.eq.s32.totalorder %s25, 0
      %p265 = por %p263, %p264
      %p266 = scmp.ne.s32.totalorder %s258, %s260
      %p267 = scmp.eq.s32.totalorder %s30, 1
      %p268 = por %p266, %p267
      %p269 = scmp.ne.s32.totalorder %s260, %s261
      %p270 = scmp.eq.s32.totalorder %s30, 0
      %p271 = por %p269, %p270
      %p272 = scmp.ne.s32.totalorder %s260, %s261
      %p273 = scmp.eq.s32.totalorder %s31, 1
      %p274 = por %p272, %p273
      %p276 = scmp.ne.s32.totalorder %s261, %s275
      %p277 = scmp.eq.s32.totalorder %s31, 0
      %p278 = por %p276, %p277
      %s279 = ssub.s32 %s25, %s32
      %p280 = scmp.eq.s32.totalorder %s279, 0
      %s282 = sadd.s32 %s281, 1
      %s283 = scalar_select %p280, %s281, %s282
      %p286 = pneg %p280
      %p287 = scmp.eq.s32.totalorder %s25, 1
      %p288 = por %p286, %p287
      %p289 = scmp.ne.s32.totalorder %s281, %s284
      %p290 = scmp.eq.s32.totalorder %s25, 0
      %p291 = por %p289, %p290
      %p292 = scmp.ne.s32.totalorder %s281, %s284
      %p293 = scmp.eq.s32.totalorder %s30, 1
      %p294 = por %p292, %p293
      %p295 = scmp.ne.s32.totalorder %s284, %s285
      %p296 = scmp.eq.s32.totalorder %s30, 0
      %p297 = por %p295, %p296
      %p298 = scmp.ne.s32.totalorder %s284, %s285
      %p299 = scmp.eq.s32.totalorder %s31, 1
      %p300 = por %p298, %p299
      %p302 = scmp.ne.s32.totalorder %s285, %s301
      %p303 = scmp.eq.s32.totalorder %s31, 0
      %p304 = por %p302, %p303
      %p305 = scmp.le.s32.totalorder 1, %s25
      %p306 = scmp.lt.s32.totalorder %s25, 3
      %p307 = pnand %p305, %p306
      %p308 = pneg %p307
      // Predicated region
      $region9: #{tpu_custom_call.1} parent=5 // pred_check
        _
      $region10: #{tpu_custom_call.1} parent=5 // pred_check_branch
        %310 = sbr.rel (%p307) target = $region12
      $region11: #{tpu_custom_call.1} parent=5 // pred_region
        %s311 = ssub.s32 %s25, 1
        // Predicated region
        $region13: #{tpu_custom_call.1} parent=11 // pred_check
          %p312 = pneg %p124
        $region14: #{tpu_custom_call.1} parent=11 // pred_check_branch
          %314 = sbr.rel (%p312) target = $region16
        $region15: #{tpu_custom_call.1} parent=11 // pred_region
          %s316 = ssub.s32 512, 512
          %317 = vsyncadd [#allocation6], %s316
          %s318 = sshll.u32 [#allocation5], 4
          %s319 = int_to_ptr.vmem [resolvable:$true] %s318
          %324 = dma.hbm_to_vmem [thread:$0]  %s3, 512, %s319, [#allocation6], 64, 64, 4
        $region16: #{tpu_custom_call.1} parent=11 // pred_fallthru
          _
        // Predicated region
        $region17: #{tpu_custom_call.1} parent=11 // pred_check
          %p325 = pneg %p145
        $region18: #{tpu_custom_call.1} parent=11 // pred_check_branch
          %327 = sbr.rel (%p325) target = $region20
        $region19: #{tpu_custom_call.1} parent=11 // pred_region
          _
        $region20: #{tpu_custom_call.1} parent=11 // pred_fallthru
          _
        // Predicated region
        $region21: #{tpu_custom_call.1} parent=11 // pred_check
          %p328 = pneg %p166
        $region22: #{tpu_custom_call.1} parent=11 // pred_check_branch
          %330 = sbr.rel (%p328) target = $region24
        $region23: #{tpu_custom_call.1} parent=11 // pred_region
          %s332 = ssub.s32 512, 512
          %333 = vsyncadd [#allocation6], %s332
          %s334 = sshll.u32 [#allocation7], 4
          %s335 = int_to_ptr.vmem [resolvable:$true] %s334
          %340 = dma.hbm_to_vmem [thread:$0]  %s5, 512, %s335, [#allocation6], 64, 64, 4
        $region24: #{tpu_custom_call.1} parent=11 // pred_fallthru
          _
        // Predicated region
        $region25: #{tpu_custom_call.1} parent=11 // pred_check
          %p341 = pneg %p187
        $region26: #{tpu_custom_call.1} parent=11 // pred_check_branch
          %343 = sbr.rel (%p341) target = $region28
        $region27: #{tpu_custom_call.1} parent=11 // pred_region
          _
        $region28: #{tpu_custom_call.1} parent=11 // pred_fallthru
          _
        // Predicated region
        $region29: #{tpu_custom_call.1} parent=11 // pred_check
          %p344 = pneg %p208
        $region30: #{tpu_custom_call.1} parent=11 // pred_check_branch
          %346 = sbr.rel (%p344) target = $region32
        $region31: #{tpu_custom_call.1} parent=11 // pred_region
          %s348 = ssub.s32 512, 512
          %349 = vsyncadd [#allocation9], %s348
          %s350 = sshll.u32 [#allocation8], 4
          %s351 = int_to_ptr.vmem [resolvable:$true] %s350
          %356 = dma.hbm_to_vmem [thread:$0]  %s7, 512, %s351, [#allocation9], 64, 64, 4
        $region32: #{tpu_custom_call.1} parent=11 // pred_fallthru
          _
        // Predicated region
        $region33: #{tpu_custom_call.1} parent=11 // pred_check
          %p357 = pneg %p229
        $region34: #{tpu_custom_call.1} parent=11 // pred_check_branch
          %359 = sbr.rel (%p357) target = $region36
        $region35: #{tpu_custom_call.1} parent=11 // pred_region
          _
        $region36: #{tpu_custom_call.1} parent=11 // pred_fallthru
          _
        // Predicated region
        $region37: #{tpu_custom_call.1} parent=11 // pred_check
          %p360 = pneg %p250
        $region38: #{tpu_custom_call.1} parent=11 // pred_check_branch
          %362 = sbr.rel (%p360) target = $region40
        $region39: #{tpu_custom_call.1} parent=11 // pred_region
          _
        $region40: #{tpu_custom_call.1} parent=11 // pred_fallthru
          _
        // Predicated region
        $region41: #{tpu_custom_call.1} parent=11 // pred_check
          %p363 = pneg %p271
        $region42: #{tpu_custom_call.1} parent=11 // pred_check_branch
          %365 = sbr.rel (%p363) target = $region44
        $region43: #{tpu_custom_call.1} parent=11 // pred_region
          _
        $region44: #{tpu_custom_call.1} parent=11 // pred_fallthru
          _
      $region12: #{tpu_custom_call.1} parent=5 // pred_fallthru
        _
      %p366 = scmp.lt.s32.totalorder %s25, 2
      // Predicated region
      $region45: #{tpu_custom_call.1} parent=5 // pred_check
        %p367 = pneg %p366
      $region46: #{tpu_custom_call.1} parent=5 // pred_check_branch
        %369 = sbr.rel (%p367) target = $region48
      $region47: #{tpu_custom_call.1} parent=5 // pred_region
        // Predicated region
        $region49: #{tpu_custom_call.1} parent=47 // pred_check
          %p370 = pneg %p45
        $region50: #{tpu_custom_call.1} parent=47 // pred_check_branch
          %372 = sbr.rel (%p370) target = $region52
        $region51: #{tpu_custom_call.1} parent=47 // pred_region
          %p373 = scmp.lt.s32.totalorder %s25, 1
          %s374 = scalar_select %p373, %s25, 1
          %s375 = smul.addr %s374, 8
          %s376 = smul.addr %s375, 8
          %s377 = scalar_lea.vmem %s0, %s376
        $region52: #{tpu_custom_call.1} parent=47 // pred_fallthru
          _
        // Predicated region
        $region53: #{tpu_custom_call.1} parent=47 // pred_check
          %p378 = pneg %p71
        $region54: #{tpu_custom_call.1} parent=47 // pred_check_branch
          %380 = sbr.rel (%p378) target = $region56
        $region55: #{tpu_custom_call.1} parent=47 // pred_region
          %p381 = scmp.lt.s32.totalorder %s25, 1
          %s382 = scalar_select %p381, %s25, 1
          %s383 = smul.addr %s382, 8
          %s384 = smul.addr %s383, 8
          %s385 = scalar_lea.vmem %s1, %s384
        $region56: #{tpu_custom_call.1} parent=47 // pred_fallthru
          _
        // Predicated region
        $region57: #{tpu_custom_call.1} parent=47 // pred_check
          %p386 = pneg %p97
        $region58: #{tpu_custom_call.1} parent=47 // pred_check_branch
          %388 = sbr.rel (%p386) target = $region60
        $region59: #{tpu_custom_call.1} parent=47 // pred_region
          %s389 = sand.u32 %s87, 1
          %s390 = scalar_lea.sflag [#allocation3], %s389
          %s391 = sand.u32 %s87, 1
          %s392 = smul.addr %s391, 64
          %s393 = scalar_lea.vmem [#allocation2], %s392
          %s395 = ssub.s32 1024, 1024
          %396 = vsyncadd %s390, %s395
          %s397 = smul.addr %s25, 8
          %s398 = smul.addr %s397, 128
          %s399 = scalar_lea.hbm %s2, %s398
          %s400 = sshll.u32 %s393, 4
          %s401 = int_to_ptr.vmem [resolvable:$true] %s400
          %406 = dma.hbm_to_vmem [thread:$0]  %s399, 1024, %s401, %s390, 128, 128, 8
        $region60: #{tpu_custom_call.1} parent=47 // pred_fallthru
          _
      $region48: #{tpu_custom_call.1} parent=5 // pred_fallthru
        _
      %p407 = scmp.le.s32.totalorder 1, %s25
      %p408 = scmp.lt.s32.totalorder %s25, 3
      %p409 = pnand %p407, %p408
      %p410 = pneg %p409
      // Predicated region
      $region61: #{tpu_custom_call.1} parent=5 // pred_check
        _
      $region62: #{tpu_custom_call.1} parent=5 // pred_check_branch
        %412 = sbr.rel (%p409) target = $region64
      $region63: #{tpu_custom_call.1} parent=5 // pred_region
        %s413 = ssub.s32 %s25, 1
        %s414 = sand.u32 %s90, 1
        %s415 = scalar_lea.sflag [#allocation3], %s414
        %s416 = sand.u32 %s90, 1
        %s417 = smul.addr %s416, 64
        %s418 = scalar_lea.vmem [#allocation2], %s417
        // Predicated region
        $region65: #{tpu_custom_call.1} parent=63 // pred_check
          %p419 = pneg %p103
        $region66: #{tpu_custom_call.1} parent=63 // pred_check_branch
          %421 = sbr.rel (%p419) target = $region68
        $region67: #{tpu_custom_call.1} parent=63 // pred_region
          %422 = dma.done %s415, 1024
        $region68: #{tpu_custom_call.1} parent=63 // pred_fallthru
          _
        // Predicated region
        $region69: #{tpu_custom_call.1} parent=63 // pred_check
          %p423 = pneg %p124
        $region70: #{tpu_custom_call.1} parent=63 // pred_check_branch
          %425 = sbr.rel (%p423) target = $region72
        $region71: #{tpu_custom_call.1} parent=63 // pred_region
          %426 = dma.done [#allocation6], 512
        $region72: #{tpu_custom_call.1} parent=63 // pred_fallthru
          _
        // Predicated region
        $region73: #{tpu_custom_call.1} parent=63 // pred_check
          %p427 = pneg %p166
        $region74: #{tpu_custom_call.1} parent=63 // pred_check_branch
          %429 = sbr.rel (%p427) target = $region76
        $region75: #{tpu_custom_call.1} parent=63 // pred_region
          %430 = dma.done [#allocation6], 512
        $region76: #{tpu_custom_call.1} parent=63 // pred_fallthru
          _
        // Predicated region
        $region77: #{tpu_custom_call.1} parent=63 // pred_check
          %p431 = pneg %p208
        $region78: #{tpu_custom_call.1} parent=63 // pred_check_branch
          %433 = sbr.rel (%p431) target = $region80
        $region79: #{tpu_custom_call.1} parent=63 // pred_region
          %434 = dma.done [#allocation9], 512
        $region80: #{tpu_custom_call.1} parent=63 // pred_fallthru
          _
        %p435 = scmp.lt.s32.totalorder %s30, 1
        %s436 = scalar_select %p435, %s30, 1
        %s437 = smul.addr %s436, 8
        %s438 = smul.addr %s437, 8
        %s439 = scalar_lea.vmem %s0, %s438
        %p440 = pneg %p51
        %p441 = pneg %p48
        %p442 = scmp.lt.s32.totalorder %s30, 1
        %s443 = scalar_select %p442, %s30, 1
        %s444 = smul.addr %s443, 8
        %s445 = smul.addr %s444, 8
        %s446 = scalar_lea.vmem %s1, %s445
        %p447 = pneg %p77
        %p448 = pneg %p74
        %s449 = sand.u32 %s90, 1
        %s450 = scalar_lea.sflag [#allocation3], %s449
        %s451 = sand.u32 %s90, 1
        %s452 = smul.addr %s451, 64
        %s453 = scalar_lea.vmem [#allocation2], %s452
        %p454 = pneg %p103
        %p455 = pneg %p100
        %p456 = pneg %p124
        %p457 = pneg %p121
        %p458 = pneg %p145
        %p459 = pneg %p142
        %p460 = pneg %p166
        %p461 = pneg %p163
        %p462 = pneg %p187
        %p463 = pneg %p184
        %p464 = pneg %p208
        %p465 = pneg %p205
        %p466 = pneg %p229
        %p467 = pneg %p226
        %p468 = pneg %p250
        %p469 = pneg %p247
        %p470 = pneg %p271
        %p471 = pneg %p268
        %p472 = pneg %p297
        %p473 = pneg %p294
        %s474 = sand.u32 %s284, 1
        %s475 = scalar_lea.sflag [#allocation4], %s474
        %s476 = sand.u32 %s284, 1
        %s477 = smul.addr %s476, 64
        %s478 = scalar_lea.vmem [#allocation10], %s477
        %p479 = scmp.lt.s32.totalorder %s30, 1
        %s480 = scalar_select %p479, %s30, 1
        %s481 = smul.addr %s480, 8
        %s482 = smul.addr %s481, 8
        %s483 = scalar_lea.vmem %s0, %s482
        %p484 = scmp.lt.s32.totalorder %s30, 1
        %s485 = scalar_select %p484, %s30, 1
        %s486 = smul.addr %s485, 8
        %s487 = smul.addr %s486, 8
        %s488 = scalar_lea.vmem %s1, %s487
        %v490 = vld [vmem:[%s483] sm:$0xff]
        %v491 = vld [vmem:[%s483 + $0x8] sm:$0xff]
        %v492 = vld [vmem:[%s483 + $0x10] sm:$0xff]
        %v493 = vld [vmem:[%s483 + $0x18] sm:$0xff]
        %v494 = vld [vmem:[%s483 + $0x20] sm:$0xff]
        %v495 = vld [vmem:[%s483 + $0x28] sm:$0xff]
        %v496 = vld [vmem:[%s483 + $0x30] sm:$0xff]
        %v497 = vld [vmem:[%s483 + $0x38] sm:$0xff]
        %v498 = vpack.c.bf16 %v491, %v490
        %v499 = vpack.c.bf16 %v493, %v492
        %v500 = vpack.c.bf16 %v495, %v494
        %v501 = vpack.c.bf16 %v497, %v496
        %v502 = vld [vmem:[#allocation5] sm:$0xf]
        %v503 = vld [vmem:[#allocation5 + $0x4] sm:$0xf]
        %v504 = vld [vmem:[#allocation5 + $0x8] sm:$0xf]
        %v505 = vld [vmem:[#allocation5 + $0xc] sm:$0xf]
        %v506 = vld [vmem:[#allocation5 + $0x10] sm:$0xf]
        %v507 = vld [vmem:[#allocation5 + $0x14] sm:$0xf]
        %v508 = vld [vmem:[#allocation5 + $0x18] sm:$0xf]
        %v509 = vld [vmem:[#allocation5 + $0x1c] sm:$0xf]
        %v510 = vld [vmem:[%s4] sm:$0xff]
        %v511 = vld [vmem:[%s4 + $0x8] sm:$0xff]
        %v512 = vld [vmem:[%s4 + $0x10] sm:$0xff]
        %v513 = vld [vmem:[%s4 + $0x18] sm:$0xff]
        %v514 = vld [vmem:[%s4 + $0x20] sm:$0xff]
        %v515 = vld [vmem:[%s4 + $0x28] sm:$0xff]
        %v516 = vld [vmem:[%s4 + $0x30] sm:$0xff]
        %v517 = vld [vmem:[%s4 + $0x38] sm:$0xff]
        %519 = vset.pattern.permute.xlu0 0
        %520 = vperm.xlu0 %519, %v510
        %v521 = vpop.permute.xlu0 %520
        %524 = vset.pattern.permute.xlu0 0
        %525 = vperm.xlu0 %524, %v511
        %v526 = vpop.permute.xlu0 %525
        %529 = vset.pattern.permute.xlu0 0
        %530 = vperm.xlu0 %529, %v512
        %v531 = vpop.permute.xlu0 %530
        %534 = vset.pattern.permute.xlu0 0
        %535 = vperm.xlu0 %534, %v513
        %v536 = vpop.permute.xlu0 %535
        %539 = vset.pattern.permute.xlu0 0
        %540 = vperm.xlu0 %539, %v514
        %v541 = vpop.permute.xlu0 %540
        %544 = vset.pattern.permute.xlu0 0
        %545 = vperm.xlu0 %544, %v515
        %v546 = vpop.permute.xlu0 %545
        %549 = vset.pattern.permute.xlu0 0
        %550 = vperm.xlu0 %549, %v516
        %v551 = vpop.permute.xlu0 %550
        %554 = vset.pattern.permute.xlu0 0
        %555 = vperm.xlu0 %554, %v517
        %v556 = vpop.permute.xlu0 %555
        %v566 = vunpack.c.l.b16 %v502
        %v567 = vunpack.c.l.b16 %v503
        %v568 = vunpack.c.l.b16 %v504
        %v569 = vunpack.c.l.b16 %v505
        %v570 = vunpack.c.l.b16 %v506
        %v571 = vunpack.c.l.b16 %v507
        %v572 = vunpack.c.l.b16 %v508
        %v573 = vunpack.c.l.b16 %v509
        %v574 = vpack.c.b16 %v567, %v566
        %v575 = vpack.c.b16 %v569, %v568
        %v576 = vpack.c.b16 %v571, %v570
        %v577 = vpack.c.b16 %v573, %v572
        %vm578 = vcmask 523264
        %v580 = vsel %vm578, %v574, 0
        %v583 = vsel %vm578, %v575, 0
        %v586 = vsel %vm578, %v576, 0
        %v589 = vsel %vm578, %v577, 0
        %591 = vmatprep.subr.bf16.mxu0 0
        %592 = vmatpush1.bf16.msra.mxu0 %v498
        %593 = vmatprep.subr.bf16.mxu0 0
        %594 = vmatpush1.bf16.msra.mxu0 %v499
        %595 = vmatprep.subr.bf16.mxu0 0
        %596 = vmatpush1.bf16.msra.mxu0 %v500
        %597 = vmatprep.subr.bf16.mxu0 0
        %598 = vmatpush1.bf16.msra.mxu0 %v501
        %599 = vmatprep.subr.bf16.mxu0 0
        %600 = vmatpush1.bf16.msra.mxu0 0
        %601 = vmatprep.subr.bf16.mxu0 0
        %602 = vmatpush1.bf16.msra.mxu0 0
        %603 = vmatprep.subr.bf16.mxu0 0
        %604 = vmatpush1.bf16.msra.mxu0 0
        %605 = vmatprep.subr.bf16.mxu0 0
        %606 = vmatpush1.bf16.msra.mxu0 0
        %607 = vmatprep.subr.bf16.mxu0 0
        %608 = vmatpush1.bf16.msra.mxu0 0
        %609 = vmatprep.subr.bf16.mxu0 0
        %610 = vmatpush1.bf16.msra.mxu0 0
        %611 = vmatprep.subr.bf16.mxu0 0
        %612 = vmatpush1.bf16.msra.mxu0 0
        %613 = vmatprep.subr.bf16.mxu0 0
        %614 = vmatpush1.bf16.msra.mxu0 0
        %615 = vmatprep.subr.bf16.mxu0 0
        %616 = vmatpush1.bf16.msra.mxu0 0
        %617 = vmatprep.subr.bf16.mxu0 0
        %618 = vmatpush1.bf16.msra.mxu0 0
        %619 = vmatprep.subr.bf16.mxu0 0
        %620 = vmatpush1.bf16.msra.mxu0 0
        %621 = vmatprep.subr.bf16.mxu0 0
        %622 = vmatpush1.bf16.msra.mxu0 0
        %623 = vmatprep.mubr.bf16.mxu0 0
        %624 = vmatmul.mubr.bf16.gmra.mrb[0].mxu0 %v580
        %v625 = vpop.f32.mrb[0].mxu0
        %v626 = vadd.f32 %v521, %v625
        %v627 = vpop.f32.mrb[0].mxu0
        %v628 = vpop.f32.mrb[0].mxu0
        %v629 = vadd.f32 %v526, %v628
        %v630 = vpop.f32.mrb[0].mxu0
        %631 = vmatprep.mubr.bf16.mxu0 0
        %632 = vmatmul.mubr.bf16.gmra.mrb[0].mxu0 %v583
        %v633 = vpop.f32.mrb[0].mxu0
        %v634 = vadd.f32 %v531, %v633
        %v635 = vpop.f32.mrb[0].mxu0
        %v636 = vpop.f32.mrb[0].mxu0
        %v637 = vadd.f32 %v536, %v636
        %v638 = vpop.f32.mrb[0].mxu0
        %639 = vmatprep.mubr.bf16.mxu0 0
        %640 = vmatmul.mubr.bf16.gmra.mrb[0].mxu0 %v586
        %v641 = vpop.f32.mrb[0].mxu0
        %v642 = vadd.f32 %v541, %v641
        %v643 = vpop.f32.mrb[0].mxu0
        %v644 = vpop.f32.mrb[0].mxu0
        %v645 = vadd.f32 %v546, %v644
        %v646 = vpop.f32.mrb[0].mxu0
        %647 = vmatprep.mubr.bf16.mxu0 0
        %648 = vmatmul.mubr.bf16.gmra.mrb[0].mxu0 %v589
        %v649 = vpop.f32.mrb[0].mxu0
        %v650 = vadd.f32 %v551, %v649
        %v651 = vpop.f32.mrb[0].mxu0
        %v652 = vpop.f32.mrb[0].mxu0
        %v653 = vadd.f32 %v556, %v652
        %v654 = vpop.f32.mrb[0].mxu0
        %655 = vdwg.mxu0
        %v656 = vld [vmem:[%s488] sm:$0xff]
        %v657 = vld [vmem:[%s488 + $0x8] sm:$0xff]
        %v658 = vld [vmem:[%s488 + $0x10] sm:$0xff]
        %v659 = vld [vmem:[%s488 + $0x18] sm:$0xff]
        %v660 = vld [vmem:[%s488 + $0x20] sm:$0xff]
        %v661 = vld [vmem:[%s488 + $0x28] sm:$0xff]
        %v662 = vld [vmem:[%s488 + $0x30] sm:$0xff]
        %v663 = vld [vmem:[%s488 + $0x38] sm:$0xff]
        %v664 = vpack.c.bf16 %v657, %v656
        %v665 = vpack.c.bf16 %v659, %v658
        %v666 = vpack.c.bf16 %v661, %v660
        %v667 = vpack.c.bf16 %v663, %v662
        %v668 = vld [vmem:[#allocation7] sm:$0xf]
        %v669 = vld [vmem:[#allocation7 + $0x4] sm:$0xf]
        %v670 = vld [vmem:[#allocation7 + $0x8] sm:$0xf]
        %v671 = vld [vmem:[#allocation7 + $0xc] sm:$0xf]
        %v672 = vld [vmem:[#allocation7 + $0x10] sm:$0xf]
        %v673 = vld [vmem:[#allocation7 + $0x14] sm:$0xf]
        %v674 = vld [vmem:[#allocation7 + $0x18] sm:$0xf]
        %v675 = vld [vmem:[#allocation7 + $0x1c] sm:$0xf]
        %v676 = vld [vmem:[%s6] sm:$0xff]
        %v677 = vld [vmem:[%s6 + $0x8] sm:$0xff]
        %v678 = vld [vmem:[%s6 + $0x10] sm:$0xff]
        %v679 = vld [vmem:[%s6 + $0x18] sm:$0xff]
        %v680 = vld [vmem:[%s6 + $0x20] sm:$0xff]
        %v681 = vld [vmem:[%s6 + $0x28] sm:$0xff]
        %v682 = vld [vmem:[%s6 + $0x30] sm:$0xff]
        %v683 = vld [vmem:[%s6 + $0x38] sm:$0xff]
        %685 = vset.pattern.permute.xlu0 0
        %686 = vperm.xlu0 %685, %v676
        %v687 = vpop.permute.xlu0 %686
        %690 = vset.pattern.permute.xlu0 0
        %691 = vperm.xlu0 %690, %v677
        %v692 = vpop.permute.xlu0 %691
        %695 = vset.pattern.permute.xlu0 0
        %696 = vperm.xlu0 %695, %v678
        %v697 = vpop.permute.xlu0 %696
        %700 = vset.pattern.permute.xlu0 0
        %701 = vperm.xlu0 %700, %v679
        %v702 = vpop.permute.xlu0 %701
        %705 = vset.pattern.permute.xlu0 0
        %706 = vperm.xlu0 %705, %v680
        %v707 = vpop.permute.xlu0 %706
        %710 = vset.pattern.permute.xlu0 0
        %711 = vperm.xlu0 %710, %v681
        %v712 = vpop.permute.xlu0 %711
        %715 = vset.pattern.permute.xlu0 0
        %716 = vperm.xlu0 %715, %v682
        %v717 = vpop.permute.xlu0 %716
        %720 = vset.pattern.permute.xlu0 0
        %721 = vperm.xlu0 %720, %v683
        %v722 = vpop.permute.xlu0 %721
        %v732 = vunpack.c.l.b16 %v668
        %v733 = vunpack.c.l.b16 %v669
        %v734 = vunpack.c.l.b16 %v670
        %v735 = vunpack.c.l.b16 %v671
        %v736 = vunpack.c.l.b16 %v672
        %v737 = vunpack.c.l.b16 %v673
        %v738 = vunpack.c.l.b16 %v674
        %v739 = vunpack.c.l.b16 %v675
        %v740 = vpack.c.b16 %v733, %v732
        %v741 = vpack.c.b16 %v735, %v734
        %v742 = vpack.c.b16 %v737, %v736
        %v743 = vpack.c.b16 %v739, %v738
        %v745 = vsel %vm578, %v740, 0
        %v748 = vsel %vm578, %v741, 0
        %v751 = vsel %vm578, %v742, 0
        %v754 = vsel %vm578, %v743, 0
        %756 = vmatprep.subr.bf16.mxu0 0
        %757 = vmatpush1.bf16.msra.mxu0 %v664
        %758 = vmatprep.subr.bf16.mxu0 0
        %759 = vmatpush1.bf16.msra.mxu0 %v665
        %760 = vmatprep.subr.bf16.mxu0 0
        %761 = vmatpush1.bf16.msra.mxu0 %v666
        %762 = vmatprep.subr.bf16.mxu0 0
        %763 = vmatpush1.bf16.msra.mxu0 %v667
        %764 = vmatprep.subr.bf16.mxu0 0
        %765 = vmatpush1.bf16.msra.mxu0 0
        %766 = vmatprep.subr.bf16.mxu0 0
        %767 = vmatpush1.bf16.msra.mxu0 0
        %768 = vmatprep.subr.bf16.mxu0 0
        %769 = vmatpush1.bf16.msra.mxu0 0
        %770 = vmatprep.subr.bf16.mxu0 0
        %771 = vmatpush1.bf16.msra.mxu0 0
        %772 = vmatprep.subr.bf16.mxu0 0
        %773 = vmatpush1.bf16.msra.mxu0 0
        %774 = vmatprep.subr.bf16.mxu0 0
        %775 = vmatpush1.bf16.msra.mxu0 0
        %776 = vmatprep.subr.bf16.mxu0 0
        %777 = vmatpush1.bf16.msra.mxu0 0
        %778 = vmatprep.subr.bf16.mxu0 0
        %779 = vmatpush1.bf16.msra.mxu0 0
        %780 = vmatprep.subr.bf16.mxu0 0
        %781 = vmatpush1.bf16.msra.mxu0 0
        %782 = vmatprep.subr.bf16.mxu0 0
        %783 = vmatpush1.bf16.msra.mxu0 0
        %784 = vmatprep.subr.bf16.mxu0 0
        %785 = vmatpush1.bf16.msra.mxu0 0
        %786 = vmatprep.subr.bf16.mxu0 0
        %787 = vmatpush1.bf16.msra.mxu0 0
        %788 = vmatprep.mubr.bf16.mxu0 0
        %789 = vmatmul.mubr.bf16.gmra.mrb[0].mxu0 %v745
        %v790 = vpop.f32.mrb[0].mxu0
        %v791 = vadd.f32 %v687, %v790
        %v792 = vpop.f32.mrb[0].mxu0
        %v793 = vpop.f32.mrb[0].mxu0
        %v794 = vadd.f32 %v692, %v793
        %v795 = vpop.f32.mrb[0].mxu0
        %796 = vmatprep.mubr.bf16.mxu0 0
        %797 = vmatmul.mubr.bf16.gmra.mrb[0].mxu0 %v748
        %v798 = vpop.f32.mrb[0].mxu0
        %v799 = vadd.f32 %v697, %v798
        %v800 = vpop.f32.mrb[0].mxu0
        %v801 = vpop.f32.mrb[0].mxu0
        %v802 = vadd.f32 %v702, %v801
        %v803 = vpop.f32.mrb[0].mxu0
        %804 = vmatprep.mubr.bf16.mxu0 0
        %805 = vmatmul.mubr.bf16.gmra.mrb[0].mxu0 %v751
        %v806 = vpop.f32.mrb[0].mxu0
        %v807 = vadd.f32 %v707, %v806
        %v808 = vpop.f32.mrb[0].mxu0
        %v809 = vpop.f32.mrb[0].mxu0
        %v810 = vadd.f32 %v712, %v809
        %v811 = vpop.f32.mrb[0].mxu0
        %812 = vmatprep.mubr.bf16.mxu0 0
        %813 = vmatmul.mubr.bf16.gmra.mrb[0].mxu0 %v754
        %v814 = vpop.f32.mrb[0].mxu0
        %v815 = vadd.f32 %v717, %v814
        %v816 = vpop.f32.mrb[0].mxu0
        %v817 = vpop.f32.mrb[0].mxu0
        %v818 = vadd.f32 %v722, %v817
        %v819 = vpop.f32.mrb[0].mxu0
        %820 = vdwg.mxu0
        %v821 = vld [vmem:[%s418] sm:$0xff]
        %v822 = vld [vmem:[%s418 + $0x8] sm:$0xff]
        %v823 = vld [vmem:[%s418 + $0x10] sm:$0xff]
        %v824 = vld [vmem:[%s418 + $0x18] sm:$0xff]
        %v825 = vld [vmem:[%s418 + $0x20] sm:$0xff]
        %v826 = vld [vmem:[%s418 + $0x28] sm:$0xff]
        %v827 = vld [vmem:[%s418 + $0x30] sm:$0xff]
        %v828 = vld [vmem:[%s418 + $0x38] sm:$0xff]
        %v829 = vpack.c.bf16 %v822, %v821
        %v830 = vpack.c.bf16 %v824, %v823
        %v831 = vpack.c.bf16 %v826, %v825
        %v832 = vpack.c.bf16 %v828, %v827
        %v833 = vld [vmem:[#allocation8] sm:$0xf]
        %v834 = vld [vmem:[#allocation8 + $0x4] sm:$0xf]
        %v835 = vld [vmem:[#allocation8 + $0x8] sm:$0xf]
        %v836 = vld [vmem:[#allocation8 + $0xc] sm:$0xf]
        %v837 = vld [vmem:[#allocation8 + $0x10] sm:$0xf]
        %v838 = vld [vmem:[#allocation8 + $0x14] sm:$0xf]
        %v839 = vld [vmem:[#allocation8 + $0x18] sm:$0xf]
        %v840 = vld [vmem:[#allocation8 + $0x1c] sm:$0xf]
        %v841 = vld [vmem:[%s8] sm:$0xff]
        %v842 = vld [vmem:[%s8 + $0x8] sm:$0xff]
        %v843 = vld [vmem:[%s8 + $0x10] sm:$0xff]
        %v844 = vld [vmem:[%s8 + $0x18] sm:$0xff]
        %v845 = vld [vmem:[%s8 + $0x20] sm:$0xff]
        %v846 = vld [vmem:[%s8 + $0x28] sm:$0xff]
        %v847 = vld [vmem:[%s8 + $0x30] sm:$0xff]
        %v848 = vld [vmem:[%s8 + $0x38] sm:$0xff]
        %850 = vset.pattern.permute.xlu0 0
        %851 = vperm.xlu0 %850, %v841
        %v852 = vpop.permute.xlu0 %851
        %855 = vset.pattern.permute.xlu0 0
        %856 = vperm.xlu0 %855, %v842
        %v857 = vpop.permute.xlu0 %856
        %860 = vset.pattern.permute.xlu0 0
        %861 = vperm.xlu0 %860, %v843
        %v862 = vpop.permute.xlu0 %861
        %865 = vset.pattern.permute.xlu0 0
        %866 = vperm.xlu0 %865, %v844
        %v867 = vpop.permute.xlu0 %866
        %870 = vset.pattern.permute.xlu0 0
        %871 = vperm.xlu0 %870, %v845
        %v872 = vpop.permute.xlu0 %871
        %875 = vset.pattern.permute.xlu0 0
        %876 = vperm.xlu0 %875, %v846
        %v877 = vpop.permute.xlu0 %876
        %880 = vset.pattern.permute.xlu0 0
        %881 = vperm.xlu0 %880, %v847
        %v882 = vpop.permute.xlu0 %881
        %885 = vset.pattern.permute.xlu0 0
        %886 = vperm.xlu0 %885, %v848
        %v887 = vpop.permute.xlu0 %886
        %v897 = vunpack.c.l.b16 %v833
        %v898 = vunpack.c.l.b16 %v834
        %v899 = vunpack.c.l.b16 %v835
        %v900 = vunpack.c.l.b16 %v836
        %v901 = vunpack.c.l.b16 %v837
        %v902 = vunpack.c.l.b16 %v838
        %v903 = vunpack.c.l.b16 %v839
        %v904 = vunpack.c.l.b16 %v840
        %v905 = vpack.c.b16 %v898, %v897
        %v906 = vpack.c.b16 %v900, %v899
        %v907 = vpack.c.b16 %v902, %v901
        %v908 = vpack.c.b16 %v904, %v903
        %v910 = vsel %vm578, %v905, 0
        %v913 = vsel %vm578, %v906, 0
        %v916 = vsel %vm578, %v907, 0
        %v919 = vsel %vm578, %v908, 0
        %921 = vmatprep.subr.bf16.mxu0 0
        %922 = vmatpush1.bf16.msra.mxu0 %v829
        %923 = vmatprep.subr.bf16.mxu0 0
        %924 = vmatpush1.bf16.msra.mxu0 %v830
        %925 = vmatprep.subr.bf16.mxu0 0
        %926 = vmatpush1.bf16.msra.mxu0 %v831
        %927 = vmatprep.subr.bf16.mxu0 0
        %928 = vmatpush1.bf16.msra.mxu0 %v832
        %929 = vmatprep.subr.bf16.mxu0 0
        %930 = vmatpush1.bf16.msra.mxu0 0
        %931 = vmatprep.subr.bf16.mxu0 0
        %932 = vmatpush1.bf16.msra.mxu0 0
        %933 = vmatprep.subr.bf16.mxu0 0
        %934 = vmatpush1.bf16.msra.mxu0 0
        %935 = vmatprep.subr.bf16.mxu0 0
        %936 = vmatpush1.bf16.msra.mxu0 0
        %937 = vmatprep.subr.bf16.mxu0 0
        %938 = vmatpush1.bf16.msra.mxu0 0
        %939 = vmatprep.subr.bf16.mxu0 0
        %940 = vmatpush1.bf16.msra.mxu0 0
        %941 = vmatprep.subr.bf16.mxu0 0
        %942 = vmatpush1.bf16.msra.mxu0 0
        %943 = vmatprep.subr.bf16.mxu0 0
        %944 = vmatpush1.bf16.msra.mxu0 0
        %945 = vmatprep.subr.bf16.mxu0 0
        %946 = vmatpush1.bf16.msra.mxu0 0
        %947 = vmatprep.subr.bf16.mxu0 0
        %948 = vmatpush1.bf16.msra.mxu0 0
        %949 = vmatprep.subr.bf16.mxu0 0
        %950 = vmatpush1.bf16.msra.mxu0 0
        %951 = vmatprep.subr.bf16.mxu0 0
        %952 = vmatpush1.bf16.msra.mxu0 0
        %953 = vmatprep.mubr.bf16.mxu0 0
        %954 = vmatmul.mubr.bf16.gmra.mrb[0].mxu0 %v910
        %v955 = vpop.f32.mrb[0].mxu0
        %v956 = vadd.f32 %v852, %v955
        %v957 = vpop.f32.mrb[0].mxu0
        %v958 = vpop.f32.mrb[0].mxu0
        %v959 = vadd.f32 %v857, %v958
        %v960 = vpop.f32.mrb[0].mxu0
        %961 = vmatprep.mubr.bf16.mxu0 0
        %962 = vmatmul.mubr.bf16.gmra.mrb[0].mxu0 %v913
        %v963 = vpop.f32.mrb[0].mxu0
        %v964 = vadd.f32 %v862, %v963
        %v965 = vpop.f32.mrb[0].mxu0
        %v966 = vpop.f32.mrb[0].mxu0
        %v967 = vadd.f32 %v867, %v966
        %v968 = vpop.f32.mrb[0].mxu0
        %969 = vmatprep.mubr.bf16.mxu0 0
        %970 = vmatmul.mubr.bf16.gmra.mrb[0].mxu0 %v916
        %v971 = vpop.f32.mrb[0].mxu0
        %v972 = vadd.f32 %v872, %v971
        %v973 = vpop.f32.mrb[0].mxu0
        %v974 = vpop.f32.mrb[0].mxu0
        %v975 = vadd.f32 %v877, %v974
        %v976 = vpop.f32.mrb[0].mxu0
        %977 = vmatprep.mubr.bf16.mxu0 0
        %978 = vmatmul.mubr.bf16.gmra.mrb[0].mxu0 %v919
        %v979 = vpop.f32.mrb[0].mxu0
        %v980 = vadd.f32 %v882, %v979
        %v981 = vpop.f32.mrb[0].mxu0
        %v982 = vpop.f32.mrb[0].mxu0
        %v983 = vadd.f32 %v887, %v982
        %v984 = vpop.f32.mrb[0].mxu0
        %985 = vdwg.mxu0
        %v986 = vpack.c.bf16 %v629, %v626
        %v987 = vpack.c.bf16 %v637, %v634
        %v988 = vpack.c.bf16 %v645, %v642
        %v989 = vpack.c.bf16 %v653, %v650
        %v990 = vpack.c.bf16 %v794, %v791
        %v991 = vpack.c.bf16 %v802, %v799
        %v992 = vpack.c.bf16 %v810, %v807
        %v993 = vpack.c.bf16 %v818, %v815
        %v994 = vpack.c.bf16 %v959, %v956
        %v995 = vpack.c.bf16 %v967, %v964
        %v996 = vpack.c.bf16 %v975, %v972
        %v997 = vpack.c.bf16 %v983, %v980
        %998 = vxpose.xlu0.c.b16.start [1/8] %v990, 128
        %999 = vxpose.xlu0.c.b16.cont [2/8] 0, 128
        %1000 = vxpose.xlu0.c.b16.cont [3/8] 0, 128
        %1001 = vxpose.xlu0.c.b16.cont [4/8] 0, 128
        %1002 = vxpose.xlu0.c.b16.cont [5/8] 0, 128
        %1003 = vxpose.xlu0.c.b16.cont [6/8] 0, 128
        %1004 = vxpose.xlu0.c.b16.cont [7/8] 0, 128
        %1005 = vxpose.xlu0.c.b16.end [8/8] 0, 128
        %v1006 = vpop.trf.xlu0
        %v1007 = vpop.trf.xlu0
        %v1008 = vpop.trf.xlu0
        %v1009 = vpop.trf.xlu0
        %v1010 = vpop.trf.xlu0
        %v1011 = vpop.trf.xlu0
        %v1012 = vpop.trf.xlu0
        %v1013 = vpop.trf.xlu0
        %vm1014 = vcmask 130048
        %v1016 = vsel %vm1014, %v1006, 0
        %v1019 = vsel %vm1014, %v1007, 0
        %v1022 = vsel %vm1014, %v1008, 0
        %v1025 = vsel %vm1014, %v1009, 0
        %v1028 = vsel %vm1014, %v1010, 0
        %v1031 = vsel %vm1014, %v1011, 0
        %v1034 = vsel %vm1014, %v1012, 0
        %v1037 = vsel %vm1014, %v1013, 0
        %1039 = vmatprep.subr.bf16.mxu0 0
        %1040 = vmatpush1.bf16.msra.mxu0 %v986
        %1041 = vmatprep.subr.bf16.mxu0 0
        %1042 = vmatpush1.bf16.msra.mxu0 0
        %1043 = vmatprep.subr.bf16.mxu0 0
        %1044 = vmatpush1.bf16.msra.mxu0 0
        %1045 = vmatprep.subr.bf16.mxu0 0
        %1046 = vmatpush1.bf16.msra.mxu0 0
        %1047 = vmatprep.subr.bf16.mxu0 0
        %1048 = vmatpush1.bf16.msra.mxu0 0
        %1049 = vmatprep.subr.bf16.mxu0 0
        %1050 = vmatpush1.bf16.msra.mxu0 0
        %1051 = vmatprep.subr.bf16.mxu0 0
        %1052 = vmatpush1.bf16.msra.mxu0 0
        %1053 = vmatprep.subr.bf16.mxu0 0
        %1054 = vmatpush1.bf16.msra.mxu0 0
        %1055 = vmatprep.subr.bf16.mxu0 0
        %1056 = vmatpush1.bf16.msra.mxu0 0
        %1057 = vmatprep.subr.bf16.mxu0 0
        %1058 = vmatpush1.bf16.msra.mxu0 0
        %1059 = vmatprep.subr.bf16.mxu0 0
        %1060 = vmatpush1.bf16.msra.mxu0 0
        %1061 = vmatprep.subr.bf16.mxu0 0
        %1062 = vmatpush1.bf16.msra.mxu0 0
        %1063 = vmatprep.subr.bf16.mxu0 0
        %1064 = vmatpush1.bf16.msra.mxu0 0
        %1065 = vmatprep.subr.bf16.mxu0 0
        %1066 = vmatpush1.bf16.msra.mxu0 0
        %1067 = vmatprep.subr.bf16.mxu0 0
        %1068 = vmatpush1.bf16.msra.mxu0 0
        %1069 = vmatprep.subr.bf16.mxu0 0
        %1070 = vmatpush1.bf16.msra.mxu0 0
        %1071 = vmatprep.mubr.bf16.mxu0 0
        %1072 = vmatmul.mubr.bf16.gmra.mrb[0].mxu0 %v1016
        %v1073 = vpop.f32.mrb[0].mxu0
        %v1074 = vadd.f32 0.0, %v1073
        %v1075 = vpop.f32.mrb[0].mxu0
        %v1076 = vpop.f32.mrb[0].mxu0
        %v1077 = vadd.f32 0.0, %v1076
        %v1078 = vpop.f32.mrb[0].mxu0
        %1079 = vmatprep.mubr.bf16.mxu0 0
        %1080 = vmatmul.mubr.bf16.gmra.mrb[0].mxu0 %v1019
        %v1081 = vpop.f32.mrb[0].mxu0
        %v1082 = vadd.f32 0.0, %v1081
        %v1083 = vpop.f32.mrb[0].mxu0
        %v1084 = vpop.f32.mrb[0].mxu0
        %v1085 = vadd.f32 0.0, %v1084
        %v1086 = vpop.f32.mrb[0].mxu0
        %1087 = vmatprep.mubr.bf16.mxu0 0
        %1088 = vmatmul.mubr.bf16.gmra.mrb[0].mxu0 %v1022
        %v1089 = vpop.f32.mrb[0].mxu0
        %v1090 = vadd.f32 0.0, %v1089
        %v1091 = vpop.f32.mrb[0].mxu0
        %v1092 = vpop.f32.mrb[0].mxu0
        %v1093 = vadd.f32 0.0, %v1092
        %v1094 = vpop.f32.mrb[0].mxu0
        %1095 = vmatprep.mubr.bf16.mxu0 0
        %1096 = vmatmul.mubr.bf16.gmra.mrb[0].mxu0 %v1025
        %v1097 = vpop.f32.mrb[0].mxu0
        %v1098 = vadd.f32 0.0, %v1097
        %v1099 = vpop.f32.mrb[0].mxu0
        %v1100 = vpop.f32.mrb[0].mxu0
        %v1101 = vadd.f32 0.0, %v1100
        %v1102 = vpop.f32.mrb[0].mxu0
        %1103 = vmatprep.mubr.bf16.mxu0 0
        %1104 = vmatmul.mubr.bf16.gmra.mrb[0].mxu0 %v1028
        %v1105 = vpop.f32.mrb[0].mxu0
        %v1106 = vadd.f32 0.0, %v1105
        %v1107 = vpop.f32.mrb[0].mxu0
        %v1108 = vpop.f32.mrb[0].mxu0
        %v1109 = vadd.f32 0.0, %v1108
        %v1110 = vpop.f32.mrb[0].mxu0
        %1111 = vmatprep.mubr.bf16.mxu0 0
        %1112 = vmatmul.mubr.bf16.gmra.mrb[0].mxu0 %v1031
        %v1113 = vpop.f32.mrb[0].mxu0
        %v1114 = vadd.f32 0.0, %v1113
        %v1115 = vpop.f32.mrb[0].mxu0
        %v1116 = vpop.f32.mrb[0].mxu0
        %v1117 = vadd.f32 0.0, %v1116
        %v1118 = vpop.f32.mrb[0].mxu0
        %1119 = vmatprep.mubr.bf16.mxu0 0
        %1120 = vmatmul.mubr.bf16.gmra.mrb[0].mxu0 %v1034
        %v1121 = vpop.f32.mrb[0].mxu0
        %v1122 = vadd.f32 0.0, %v1121
        %v1123 = vpop.f32.mrb[0].mxu0
        %v1124 = vpop.f32.mrb[0].mxu0
        %v1125 = vadd.f32 0.0, %v1124
        %v1126 = vpop.f32.mrb[0].mxu0
        %1127 = vmatprep.mubr.bf16.mxu0 0
        %1128 = vmatmul.mubr.bf16.gmra.mrb[0].mxu0 %v1037
        %v1129 = vpop.f32.mrb[0].mxu0
        %v1130 = vadd.f32 0.0, %v1129
        %v1131 = vpop.f32.mrb[0].mxu0
        %v1132 = vpop.f32.mrb[0].mxu0
        %v1133 = vadd.f32 0.0, %v1132
        %v1134 = vpop.f32.mrb[0].mxu0
        %1135 = vdwg.mxu0
        %1136 = vxpose.xlu0.c.b16.start [1/8] %v991, 128
        %1137 = vxpose.xlu0.c.b16.cont [2/8] 0, 128
        %1138 = vxpose.xlu0.c.b16.cont [3/8] 0, 128
        %1139 = vxpose.xlu0.c.b16.cont [4/8] 0, 128
        %1140 = vxpose.xlu0.c.b16.cont [5/8] 0, 128
        %1141 = vxpose.xlu0.c.b16.cont [6/8] 0, 128
        %1142 = vxpose.xlu0.c.b16.cont [7/8] 0, 128
        %1143 = vxpose.xlu0.c.b16.end [8/8] 0, 128
        %v1144 = vpop.trf.xlu0
        %v1145 = vpop.trf.xlu0
        %v1146 = vpop.trf.xlu0
        %v1147 = vpop.trf.xlu0
        %v1148 = vpop.trf.xlu0
        %v1149 = vpop.trf.xlu0
        %v1150 = vpop.trf.xlu0
        %v1151 = vpop.trf.xlu0
        %v1153 = vsel %vm1014, %v1144, 0
        %v1156 = vsel %vm1014, %v1145, 0
        %v1159 = vsel %vm1014, %v1146, 0
        %v1162 = vsel %vm1014, %v1147, 0
        %v1165 = vsel %vm1014, %v1148, 0
        %v1168 = vsel %vm1014, %v1149, 0
        %v1171 = vsel %vm1014, %v1150, 0
        %v1174 = vsel %vm1014, %v1151, 0
        %1176 = vmatprep.subr.bf16.mxu0 0
        %1177 = vmatpush1.bf16.msra.mxu0 %v987
        %1178 = vmatprep.subr.bf16.mxu0 0
        %1179 = vmatpush1.bf16.msra.mxu0 0
        %1180 = vmatprep.subr.bf16.mxu0 0
        %1181 = vmatpush1.bf16.msra.mxu0 0
        %1182 = vmatprep.subr.bf16.mxu0 0
        %1183 = vmatpush1.bf16.msra.mxu0 0
        %1184 = vmatprep.subr.bf16.mxu0 0
        %1185 = vmatpush1.bf16.msra.mxu0 0
        %1186 = vmatprep.subr.bf16.mxu0 0
        %1187 = vmatpush1.bf16.msra.mxu0 0
        %1188 = vmatprep.subr.bf16.mxu0 0
        %1189 = vmatpush1.bf16.msra.mxu0 0
        %1190 = vmatprep.subr.bf16.mxu0 0
        %1191 = vmatpush1.bf16.msra.mxu0 0
        %1192 = vmatprep.subr.bf16.mxu0 0
        %1193 = vmatpush1.bf16.msra.mxu0 0
        %1194 = vmatprep.subr.bf16.mxu0 0
        %1195 = vmatpush1.bf16.msra.mxu0 0
        %1196 = vmatprep.subr.bf16.mxu0 0
        %1197 = vmatpush1.bf16.msra.mxu0 0
        %1198 = vmatprep.subr.bf16.mxu0 0
        %1199 = vmatpush1.bf16.msra.mxu0 0
        %1200 = vmatprep.subr.bf16.mxu0 0
        %1201 = vmatpush1.bf16.msra.mxu0 0
        %1202 = vmatprep.subr.bf16.mxu0 0
        %1203 = vmatpush1.bf16.msra.mxu0 0
        %1204 = vmatprep.subr.bf16.mxu0 0
        %1205 = vmatpush1.bf16.msra.mxu0 0
        %1206 = vmatprep.subr.bf16.mxu0 0
        %1207 = vmatpush1.bf16.msra.mxu0 0
        %1208 = vmatprep.mubr.bf16.mxu0 0
        %1209 = vmatmul.mubr.bf16.gmra.mrb[0].mxu0 %v1153
        %v1210 = vpop.f32.mrb[0].mxu0
        %v1211 = vadd.f32 0.0, %v1210
        %v1212 = vpop.f32.mrb[0].mxu0
        %v1213 = vpop.f32.mrb[0].mxu0
        %v1214 = vadd.f32 0.0, %v1213
        %v1215 = vpop.f32.mrb[0].mxu0
        %1216 = vmatprep.mubr.bf16.mxu0 0
        %1217 = vmatmul.mubr.bf16.gmra.mrb[0].mxu0 %v1156
        %v1218 = vpop.f32.mrb[0].mxu0
        %v1219 = vadd.f32 0.0, %v1218
        %v1220 = vpop.f32.mrb[0].mxu0
        %v1221 = vpop.f32.mrb[0].mxu0
        %v1222 = vadd.f32 0.0, %v1221
        %v1223 = vpop.f32.mrb[0].mxu0
        %1224 = vmatprep.mubr.bf16.mxu0 0
        %1225 = vmatmul.mubr.bf16.gmra.mrb[0].mxu0 %v1159
        %v1226 = vpop.f32.mrb[0].mxu0
        %v1227 = vadd.f32 0.0, %v1226
        %v1228 = vpop.f32.mrb[0].mxu0
        %v1229 = vpop.f32.mrb[0].mxu0
        %v1230 = vadd.f32 0.0, %v1229
        %v1231 = vpop.f32.mrb[0].mxu0
        %1232 = vmatprep.mubr.bf16.mxu0 0
        %1233 = vmatmul.mubr.bf16.gmra.mrb[0].mxu0 %v1162
        %v1234 = vpop.f32.mrb[0].mxu0
        %v1235 = vadd.f32 0.0, %v1234
        %v1236 = vpop.f32.mrb[0].mxu0
        %v1237 = vpop.f32.mrb[0].mxu0
        %v1238 = vadd.f32 0.0, %v1237
        %v1239 = vpop.f32.mrb[0].mxu0
        %1240 = vmatprep.mubr.bf16.mxu0 0
        %1241 = vmatmul.mubr.bf16.gmra.mrb[0].mxu0 %v1165
        %v1242 = vpop.f32.mrb[0].mxu0
        %v1243 = vadd.f32 0.0, %v1242
        %v1244 = vpop.f32.mrb[0].mxu0
        %v1245 = vpop.f32.mrb[0].mxu0
        %v1246 = vadd.f32 0.0, %v1245
        %v1247 = vpop.f32.mrb[0].mxu0
        %1248 = vmatprep.mubr.bf16.mxu0 0
        %1249 = vmatmul.mubr.bf16.gmra.mrb[0].mxu0 %v1168
        %v1250 = vpop.f32.mrb[0].mxu0
        %v1251 = vadd.f32 0.0, %v1250
        %v1252 = vpop.f32.mrb[0].mxu0
        %v1253 = vpop.f32.mrb[0].mxu0
        %v1254 = vadd.f32 0.0, %v1253
        %v1255 = vpop.f32.mrb[0].mxu0
        %1256 = vmatprep.mubr.bf16.mxu0 0
        %1257 = vmatmul.mubr.bf16.gmra.mrb[0].mxu0 %v1171
        %v1258 = vpop.f32.mrb[0].mxu0
        %v1259 = vadd.f32 0.0, %v1258
        %v1260 = vpop.f32.mrb[0].mxu0
        %v1261 = vpop.f32.mrb[0].mxu0
        %v1262 = vadd.f32 0.0, %v1261
        %v1263 = vpop.f32.mrb[0].mxu0
        %1264 = vmatprep.mubr.bf16.mxu0 0
        %1265 = vmatmul.mubr.bf16.gmra.mrb[0].mxu0 %v1174
        %v1266 = vpop.f32.mrb[0].mxu0
        %v1267 = vadd.f32 0.0, %v1266
        %v1268 = vpop.f32.mrb[0].mxu0
        %v1269 = vpop.f32.mrb[0].mxu0
        %v1270 = vadd.f32 0.0, %v1269
        %v1271 = vpop.f32.mrb[0].mxu0
        %1272 = vdwg.mxu0
        %1273 = vxpose.xlu0.c.b16.start [1/8] %v992, 128
        %1274 = vxpose.xlu0.c.b16.cont [2/8] 0, 128
        %1275 = vxpose.xlu0.c.b16.cont [3/8] 0, 128
        %1276 = vxpose.xlu0.c.b16.cont [4/8] 0, 128
        %1277 = vxpose.xlu0.c.b16.cont [5/8] 0, 128
        %1278 = vxpose.xlu0.c.b16.cont [6/8] 0, 128
        %1279 = vxpose.xlu0.c.b16.cont [7/8] 0, 128
        %1280 = vxpose.xlu0.c.b16.end [8/8] 0, 128
        %v1281 = vpop.trf.xlu0
        %v1282 = vpop.trf.xlu0
        %v1283 = vpop.trf.xlu0
        %v1284 = vpop.trf.xlu0
        %v1285 = vpop.trf.xlu0
        %v1286 = vpop.trf.xlu0
        %v1287 = vpop.trf.xlu0
        %v1288 = vpop.trf.xlu0
        %v1290 = vsel %vm1014, %v1281, 0
        %v1293 = vsel %vm1014, %v1282, 0
        %v1296 = vsel %vm1014, %v1283, 0
        %v1299 = vsel %vm1014, %v1284, 0
        %v1302 = vsel %vm1014, %v1285, 0
        %v1305 = vsel %vm1014, %v1286, 0
        %v1308 = vsel %vm1014, %v1287, 0
        %v1311 = vsel %vm1014, %v1288, 0
        %1313 = vmatprep.subr.bf16.mxu0 0
        %1314 = vmatpush1.bf16.msra.mxu0 %v988
        %1315 = vmatprep.subr.bf16.mxu0 0
        %1316 = vmatpush1.bf16.msra.mxu0 0
        %1317 = vmatprep.subr.bf16.mxu0 0
        %1318 = vmatpush1.bf16.msra.mxu0 0
        %1319 = vmatprep.subr.bf16.mxu0 0
        %1320 = vmatpush1.bf16.msra.mxu0 0
        %1321 = vmatprep.subr.bf16.mxu0 0
        %1322 = vmatpush1.bf16.msra.mxu0 0
        %1323 = vmatprep.subr.bf16.mxu0 0
        %1324 = vmatpush1.bf16.msra.mxu0 0
        %1325 = vmatprep.subr.bf16.mxu0 0
        %1326 = vmatpush1.bf16.msra.mxu0 0
        %1327 = vmatprep.subr.bf16.mxu0 0
        %1328 = vmatpush1.bf16.msra.mxu0 0
        %1329 = vmatprep.subr.bf16.mxu0 0
        %1330 = vmatpush1.bf16.msra.mxu0 0
        %1331 = vmatprep.subr.bf16.mxu0 0
        %1332 = vmatpush1.bf16.msra.mxu0 0
        %1333 = vmatprep.subr.bf16.mxu0 0
        %1334 = vmatpush1.bf16.msra.mxu0 0
        %1335 = vmatprep.subr.bf16.mxu0 0
        %1336 = vmatpush1.bf16.msra.mxu0 0
        %1337 = vmatprep.subr.bf16.mxu0 0
        %1338 = vmatpush1.bf16.msra.mxu0 0
        %1339 = vmatprep.subr.bf16.mxu0 0
        %1340 = vmatpush1.bf16.msra.mxu0 0
        %1341 = vmatprep.subr.bf16.mxu0 0
        %1342 = vmatpush1.bf16.msra.mxu0 0
        %1343 = vmatprep.subr.bf16.mxu0 0
        %1344 = vmatpush1.bf16.msra.mxu0 0
        %1345 = vmatprep.mubr.bf16.mxu0 0
        %1346 = vmatmul.mubr.bf16.gmra.mrb[0].mxu0 %v1290
        %v1347 = vpop.f32.mrb[0].mxu0
        %v1348 = vadd.f32 0.0, %v1347
        %v1349 = vpop.f32.mrb[0].mxu0
        %v1350 = vpop.f32.mrb[0].mxu0
        %v1351 = vadd.f32 0.0, %v1350
        %v1352 = vpop.f32.mrb[0].mxu0
        %1353 = vmatprep.mubr.bf16.mxu0 0
        %1354 = vmatmul.mubr.bf16.gmra.mrb[0].mxu0 %v1293
        %v1355 = vpop.f32.mrb[0].mxu0
        %v1356 = vadd.f32 0.0, %v1355
        %v1357 = vpop.f32.mrb[0].mxu0
        %v1358 = vpop.f32.mrb[0].mxu0
        %v1359 = vadd.f32 0.0, %v1358
        %v1360 = vpop.f32.mrb[0].mxu0
        %1361 = vmatprep.mubr.bf16.mxu0 0
        %1362 = vmatmul.mubr.bf16.gmra.mrb[0].mxu0 %v1296
        %v1363 = vpop.f32.mrb[0].mxu0
        %v1364 = vadd.f32 0.0, %v1363
        %v1365 = vpop.f32.mrb[0].mxu0
        %v1366 = vpop.f32.mrb[0].mxu0
        %v1367 = vadd.f32 0.0, %v1366
        %v1368 = vpop.f32.mrb[0].mxu0
        %1369 = vmatprep.mubr.bf16.mxu0 0
        %1370 = vmatmul.mubr.bf16.gmra.mrb[0].mxu0 %v1299
        %v1371 = vpop.f32.mrb[0].mxu0
        %v1372 = vadd.f32 0.0, %v1371
        %v1373 = vpop.f32.mrb[0].mxu0
        %v1374 = vpop.f32.mrb[0].mxu0
        %v1375 = vadd.f32 0.0, %v1374
        %v1376 = vpop.f32.mrb[0].mxu0
        %1377 = vmatprep.mubr.bf16.mxu0 0
        %1378 = vmatmul.mubr.bf16.gmra.mrb[0].mxu0 %v1302
        %v1379 = vpop.f32.mrb[0].mxu0
        %v1380 = vadd.f32 0.0, %v1379
        %v1381 = vpop.f32.mrb[0].mxu0
        %v1382 = vpop.f32.mrb[0].mxu0
        %v1383 = vadd.f32 0.0, %v1382
        %v1384 = vpop.f32.mrb[0].mxu0
        %1385 = vmatprep.mubr.bf16.mxu0 0
        %1386 = vmatmul.mubr.bf16.gmra.mrb[0].mxu0 %v1305
        %v1387 = vpop.f32.mrb[0].mxu0
        %v1388 = vadd.f32 0.0, %v1387
        %v1389 = vpop.f32.mrb[0].mxu0
        %v1390 = vpop.f32.mrb[0].mxu0
        %v1391 = vadd.f32 0.0, %v1390
        %v1392 = vpop.f32.mrb[0].mxu0
        %1393 = vmatprep.mubr.bf16.mxu0 0
        %1394 = vmatmul.mubr.bf16.gmra.mrb[0].mxu0 %v1308
        %v1395 = vpop.f32.mrb[0].mxu0
        %v1396 = vadd.f32 0.0, %v1395
        %v1397 = vpop.f32.mrb[0].mxu0
        %v1398 = vpop.f32.mrb[0].mxu0
        %v1399 = vadd.f32 0.0, %v1398
        %v1400 = vpop.f32.mrb[0].mxu0
        %1401 = vmatprep.mubr.bf16.mxu0 0
        %1402 = vmatmul.mubr.bf16.gmra.mrb[0].mxu0 %v1311
        %v1403 = vpop.f32.mrb[0].mxu0
        %v1404 = vadd.f32 0.0, %v1403
        %v1405 = vpop.f32.mrb[0].mxu0
        %v1406 = vpop.f32.mrb[0].mxu0
        %v1407 = vadd.f32 0.0, %v1406
        %v1408 = vpop.f32.mrb[0].mxu0
        %1409 = vdwg.mxu0
        %1410 = vxpose.xlu0.c.b16.start [1/8] %v993, 128
        %1411 = vxpose.xlu0.c.b16.cont [2/8] 0, 128
        %1412 = vxpose.xlu0.c.b16.cont [3/8] 0, 128
        %1413 = vxpose.xlu0.c.b16.cont [4/8] 0, 128
        %1414 = vxpose.xlu0.c.b16.cont [5/8] 0, 128
        %1415 = vxpose.xlu0.c.b16.cont [6/8] 0, 128
        %1416 = vxpose.xlu0.c.b16.cont [7/8] 0, 128
        %1417 = vxpose.xlu0.c.b16.end [8/8] 0, 128
        %v1418 = vpop.trf.xlu0
        %v1419 = vpop.trf.xlu0
        %v1420 = vpop.trf.xlu0
        %v1421 = vpop.trf.xlu0
        %v1422 = vpop.trf.xlu0
        %v1423 = vpop.trf.xlu0
        %v1424 = vpop.trf.xlu0
        %v1425 = vpop.trf.xlu0
        %v1427 = vsel %vm1014, %v1418, 0
        %v1430 = vsel %vm1014, %v1419, 0
        %v1433 = vsel %vm1014, %v1420, 0
        %v1436 = vsel %vm1014, %v1421, 0
        %v1439 = vsel %vm1014, %v1422, 0
        %v1442 = vsel %vm1014, %v1423, 0
        %v1445 = vsel %vm1014, %v1424, 0
        %v1448 = vsel %vm1014, %v1425, 0
        %1450 = vmatprep.subr.bf16.mxu0 0
        %1451 = vmatpush1.bf16.msra.mxu0 %v989
        %1452 = vmatprep.subr.bf16.mxu0 0
        %1453 = vmatpush1.bf16.msra.mxu0 0
        %1454 = vmatprep.subr.bf16.mxu0 0
        %1455 = vmatpush1.bf16.msra.mxu0 0
        %1456 = vmatprep.subr.bf16.mxu0 0
        %1457 = vmatpush1.bf16.msra.mxu0 0
        %1458 = vmatprep.subr.bf16.mxu0 0
        %1459 = vmatpush1.bf16.msra.mxu0 0
        %1460 = vmatprep.subr.bf16.mxu0 0
        %1461 = vmatpush1.bf16.msra.mxu0 0
        %1462 = vmatprep.subr.bf16.mxu0 0
        %1463 = vmatpush1.bf16.msra.mxu0 0
        %1464 = vmatprep.subr.bf16.mxu0 0
        %1465 = vmatpush1.bf16.msra.mxu0 0
        %1466 = vmatprep.subr.bf16.mxu0 0
        %1467 = vmatpush1.bf16.msra.mxu0 0
        %1468 = vmatprep.subr.bf16.mxu0 0
        %1469 = vmatpush1.bf16.msra.mxu0 0
        %1470 = vmatprep.subr.bf16.mxu0 0
        %1471 = vmatpush1.bf16.msra.mxu0 0
        %1472 = vmatprep.subr.bf16.mxu0 0
        %1473 = vmatpush1.bf16.msra.mxu0 0
        %1474 = vmatprep.subr.bf16.mxu0 0
        %1475 = vmatpush1.bf16.msra.mxu0 0
        %1476 = vmatprep.subr.bf16.mxu0 0
        %1477 = vmatpush1.bf16.msra.mxu0 0
        %1478 = vmatprep.subr.bf16.mxu0 0
        %1479 = vmatpush1.bf16.msra.mxu0 0
        %1480 = vmatprep.subr.bf16.mxu0 0
        %1481 = vmatpush1.bf16.msra.mxu0 0
        %1482 = vmatprep.mubr.bf16.mxu0 0
        %1483 = vmatmul.mubr.bf16.gmra.mrb[0].mxu0 %v1427
        %v1484 = vpop.f32.mrb[0].mxu0
        %v1485 = vadd.f32 0.0, %v1484
        %v1486 = vpop.f32.mrb[0].mxu0
        %v1487 = vpop.f32.mrb[0].mxu0
        %v1488 = vadd.f32 0.0, %v1487
        %v1489 = vpop.f32.mrb[0].mxu0
        %1490 = vmatprep.mubr.bf16.mxu0 0
        %1491 = vmatmul.mubr.bf16.gmra.mrb[0].mxu0 %v1430
        %v1492 = vpop.f32.mrb[0].mxu0
        %v1493 = vadd.f32 0.0, %v1492
        %v1494 = vpop.f32.mrb[0].mxu0
        %v1495 = vpop.f32.mrb[0].mxu0
        %v1496 = vadd.f32 0.0, %v1495
        %v1497 = vpop.f32.mrb[0].mxu0
        %1498 = vmatprep.mubr.bf16.mxu0 0
        %1499 = vmatmul.mubr.bf16.gmra.mrb[0].mxu0 %v1433
        %v1500 = vpop.f32.mrb[0].mxu0
        %v1501 = vadd.f32 0.0, %v1500
        %v1502 = vpop.f32.mrb[0].mxu0
        %v1503 = vpop.f32.mrb[0].mxu0
        %v1504 = vadd.f32 0.0, %v1503
        %v1505 = vpop.f32.mrb[0].mxu0
        %1506 = vmatprep.mubr.bf16.mxu0 0
        %1507 = vmatmul.mubr.bf16.gmra.mrb[0].mxu0 %v1436
        %v1508 = vpop.f32.mrb[0].mxu0
        %v1509 = vadd.f32 0.0, %v1508
        %v1510 = vpop.f32.mrb[0].mxu0
        %v1511 = vpop.f32.mrb[0].mxu0
        %v1512 = vadd.f32 0.0, %v1511
        %v1513 = vpop.f32.mrb[0].mxu0
        %1514 = vmatprep.mubr.bf16.mxu0 0
        %1515 = vmatmul.mubr.bf16.gmra.mrb[0].mxu0 %v1439
        %v1516 = vpop.f32.mrb[0].mxu0
        %v1517 = vadd.f32 0.0, %v1516
        %v1518 = vpop.f32.mrb[0].mxu0
        %v1519 = vpop.f32.mrb[0].mxu0
        %v1520 = vadd.f32 0.0, %v1519
        %v1521 = vpop.f32.mrb[0].mxu0
        %1522 = vmatprep.mubr.bf16.mxu0 0
        %1523 = vmatmul.mubr.bf16.gmra.mrb[0].mxu0 %v1442
        %v1524 = vpop.f32.mrb[0].mxu0
        %v1525 = vadd.f32 0.0, %v1524
        %v1526 = vpop.f32.mrb[0].mxu0
        %v1527 = vpop.f32.mrb[0].mxu0
        %v1528 = vadd.f32 0.0, %v1527
        %v1529 = vpop.f32.mrb[0].mxu0
        %1530 = vmatprep.mubr.bf16.mxu0 0
        %1531 = vmatmul.mubr.bf16.gmra.mrb[0].mxu0 %v1445
        %v1532 = vpop.f32.mrb[0].mxu0
        %v1533 = vadd.f32 0.0, %v1532
        %v1534 = vpop.f32.mrb[0].mxu0
        %v1535 = vpop.f32.mrb[0].mxu0
        %v1536 = vadd.f32 0.0, %v1535
        %v1537 = vpop.f32.mrb[0].mxu0
        %1538 = vmatprep.mubr.bf16.mxu0 0
        %1539 = vmatmul.mubr.bf16.gmra.mrb[0].mxu0 %v1448
        %v1540 = vpop.f32.mrb[0].mxu0
        %v1541 = vadd.f32 0.0, %v1540
        %v1542 = vpop.f32.mrb[0].mxu0
        %v1543 = vpop.f32.mrb[0].mxu0
        %v1544 = vadd.f32 0.0, %v1543
        %v1545 = vpop.f32.mrb[0].mxu0
        %1546 = vdwg.mxu0
        %v1547 = vmax.f32 %v1074, %v1077
        %v1548 = vmax.f32 %v1547, %v1082
        %v1549 = vmax.f32 %v1548, %v1085
        %v1550 = vmax.f32 %v1549, %v1090
        %v1551 = vmax.f32 %v1550, %v1093
        %v1552 = vmax.f32 %v1551, %v1098
        %v1553 = vmax.f32 %v1552, %v1101
        %v1554 = vmax.f32 %v1553, %v1106
        %v1555 = vmax.f32 %v1554, %v1109
        %v1556 = vmax.f32 %v1555, %v1114
        %v1557 = vmax.f32 %v1556, %v1117
        %v1558 = vmax.f32 %v1557, %v1122
        %v1559 = vmax.f32 %v1558, %v1125
        %v1560 = vmax.f32 %v1559, %v1130
        %v1561 = vmax.f32 %v1560, %v1133
        %v1562 = vrot.slane %v1561, 4
        %v1563 = vmax.f32 %v1561, %v1562
        %v1564 = vrot.slane %v1563, 2
        %v1565 = vmax.f32 %v1563, %v1564
        %v1566 = vrot.slane %v1565, 1
        %v1567 = vmax.f32 %v1565, %v1566
        %v1568 = vmax.f32 %v1211, %v1214
        %v1569 = vmax.f32 %v1568, %v1219
        %v1570 = vmax.f32 %v1569, %v1222
        %v1571 = vmax.f32 %v1570, %v1227
        %v1572 = vmax.f32 %v1571, %v1230
        %v1573 = vmax.f32 %v1572, %v1235
        %v1574 = vmax.f32 %v1573, %v1238
        %v1575 = vmax.f32 %v1574, %v1243
        %v1576 = vmax.f32 %v1575, %v1246
        %v1577 = vmax.f32 %v1576, %v1251
        %v1578 = vmax.f32 %v1577, %v1254
        %v1579 = vmax.f32 %v1578, %v1259
        %v1580 = vmax.f32 %v1579, %v1262
        %v1581 = vmax.f32 %v1580, %v1267
        %v1582 = vmax.f32 %v1581, %v1270
        %v1583 = vrot.slane %v1582, 4
        %v1584 = vmax.f32 %v1582, %v1583
        %v1585 = vrot.slane %v1584, 2
        %v1586 = vmax.f32 %v1584, %v1585
        %v1587 = vrot.slane %v1586, 1
        %v1588 = vmax.f32 %v1586, %v1587
        %v1589 = vmax.f32 %v1348, %v1351
        %v1590 = vmax.f32 %v1589, %v1356
        %v1591 = vmax.f32 %v1590, %v1359
        %v1592 = vmax.f32 %v1591, %v1364
        %v1593 = vmax.f32 %v1592, %v1367
        %v1594 = vmax.f32 %v1593, %v1372
        %v1595 = vmax.f32 %v1594, %v1375
        %v1596 = vmax.f32 %v1595, %v1380
        %v1597 = vmax.f32 %v1596, %v1383
        %v1598 = vmax.f32 %v1597, %v1388
        %v1599 = vmax.f32 %v1598, %v1391
        %v1600 = vmax.f32 %v1599, %v1396
        %v1601 = vmax.f32 %v1600, %v1399
        %v1602 = vmax.f32 %v1601, %v1404
        %v1603 = vmax.f32 %v1602, %v1407
        %v1604 = vrot.slane %v1603, 4
        %v1605 = vmax.f32 %v1603, %v1604
        %v1606 = vrot.slane %v1605, 2
        %v1607 = vmax.f32 %v1605, %v1606
        %v1608 = vrot.slane %v1607, 1
        %v1609 = vmax.f32 %v1607, %v1608
        %v1610 = vmax.f32 %v1485, %v1488
        %v1611 = vmax.f32 %v1610, %v1493
        %v1612 = vmax.f32 %v1611, %v1496
        %v1613 = vmax.f32 %v1612, %v1501
        %v1614 = vmax.f32 %v1613, %v1504
        %v1615 = vmax.f32 %v1614, %v1509
        %v1616 = vmax.f32 %v1615, %v1512
        %v1617 = vmax.f32 %v1616, %v1517
        %v1618 = vmax.f32 %v1617, %v1520
        %v1619 = vmax.f32 %v1618, %v1525
        %v1620 = vmax.f32 %v1619, %v1528
        %v1621 = vmax.f32 %v1620, %v1533
        %v1622 = vmax.f32 %v1621, %v1536
        %v1623 = vmax.f32 %v1622, %v1541
        %v1624 = vmax.f32 %v1623, %v1544
        %v1625 = vrot.slane %v1624, 4
        %v1626 = vmax.f32 %v1624, %v1625
        %v1627 = vrot.slane %v1626, 2
        %v1628 = vmax.f32 %v1626, %v1627
        %v1629 = vrot.slane %v1628, 1
        %v1630 = vmax.f32 %v1628, %v1629
        %v1631 = vsub.f32 %v1074, %v1567
        %v1632 = vsub.f32 %v1077, %v1567
        %v1633 = vsub.f32 %v1082, %v1567
        %v1634 = vsub.f32 %v1085, %v1567
        %v1635 = vsub.f32 %v1090, %v1567
        %v1636 = vsub.f32 %v1093, %v1567
        %v1637 = vsub.f32 %v1098, %v1567
        %v1638 = vsub.f32 %v1101, %v1567
        %v1639 = vsub.f32 %v1106, %v1567
        %v1640 = vsub.f32 %v1109, %v1567
        %v1641 = vsub.f32 %v1114, %v1567
        %v1642 = vsub.f32 %v1117, %v1567
        %v1643 = vsub.f32 %v1122, %v1567
        %v1644 = vsub.f32 %v1125, %v1567
        %v1645 = vsub.f32 %v1130, %v1567
        %v1646 = vsub.f32 %v1133, %v1567
        %v1647 = vsub.f32 %v1211, %v1588
        %v1648 = vsub.f32 %v1214, %v1588
        %v1649 = vsub.f32 %v1219, %v1588
        %v1650 = vsub.f32 %v1222, %v1588
        %v1651 = vsub.f32 %v1227, %v1588
        %v1652 = vsub.f32 %v1230, %v1588
        %v1653 = vsub.f32 %v1235, %v1588
        %v1654 = vsub.f32 %v1238, %v1588
        %v1655 = vsub.f32 %v1243, %v1588
        %v1656 = vsub.f32 %v1246, %v1588
        %v1657 = vsub.f32 %v1251, %v1588
        %v1658 = vsub.f32 %v1254, %v1588
        %v1659 = vsub.f32 %v1259, %v1588
        %v1660 = vsub.f32 %v1262, %v1588
        %v1661 = vsub.f32 %v1267, %v1588
        %v1662 = vsub.f32 %v1270, %v1588
        %v1663 = vsub.f32 %v1348, %v1609
        %v1664 = vsub.f32 %v1351, %v1609
        %v1665 = vsub.f32 %v1356, %v1609
        %v1666 = vsub.f32 %v1359, %v1609
        %v1667 = vsub.f32 %v1364, %v1609
        %v1668 = vsub.f32 %v1367, %v1609
        %v1669 = vsub.f32 %v1372, %v1609
        %v1670 = vsub.f32 %v1375, %v1609
        %v1671 = vsub.f32 %v1380, %v1609
        %v1672 = vsub.f32 %v1383, %v1609
        %v1673 = vsub.f32 %v1388, %v1609
        %v1674 = vsub.f32 %v1391, %v1609
        %v1675 = vsub.f32 %v1396, %v1609
        %v1676 = vsub.f32 %v1399, %v1609
        %v1677 = vsub.f32 %v1404, %v1609
        %v1678 = vsub.f32 %v1407, %v1609
        %v1679 = vsub.f32 %v1485, %v1630
        %v1680 = vsub.f32 %v1488, %v1630
        %v1681 = vsub.f32 %v1493, %v1630
        %v1682 = vsub.f32 %v1496, %v1630
        %v1683 = vsub.f32 %v1501, %v1630
        %v1684 = vsub.f32 %v1504, %v1630
        %v1685 = vsub.f32 %v1509, %v1630
        %v1686 = vsub.f32 %v1512, %v1630
        %v1687 = vsub.f32 %v1517, %v1630
        %v1688 = vsub.f32 %v1520, %v1630
        %v1689 = vsub.f32 %v1525, %v1630
        %v1690 = vsub.f32 %v1528, %v1630
        %v1691 = vsub.f32 %v1533, %v1630
        %v1692 = vsub.f32 %v1536, %v1630
        %v1693 = vsub.f32 %v1541, %v1630
        %v1694 = vsub.f32 %v1544, %v1630
        %v1695 = vmul.f32 %v1631, 1.442695
        %v1696 = vpow.pop %v1695
        %v1697 = vmul.f32 %v1632, 1.442695
        %v1698 = vpow.pop %v1697
        %v1699 = vmul.f32 %v1633, 1.442695
        %v1700 = vpow.pop %v1699
        %v1701 = vmul.f32 %v1634, 1.442695
        %v1702 = vpow.pop %v1701
        %v1703 = vmul.f32 %v1635, 1.442695
        %v1704 = vpow.pop %v1703
        %v1705 = vmul.f32 %v1636, 1.442695
        %v1706 = vpow.pop %v1705
        %v1707 = vmul.f32 %v1637, 1.442695
        %v1708 = vpow.pop %v1707
        %v1709 = vmul.f32 %v1638, 1.442695
        %v1710 = vpow.pop %v1709
        %v1711 = vmul.f32 %v1639, 1.442695
        %v1712 = vpow.pop %v1711
        %v1713 = vmul.f32 %v1640, 1.442695
        %v1714 = vpow.pop %v1713
        %v1715 = vmul.f32 %v1641, 1.442695
        %v1716 = vpow.pop %v1715
        %v1717 = vmul.f32 %v1642, 1.442695
        %v1718 = vpow.pop %v1717
        %v1719 = vmul.f32 %v1643, 1.442695
        %v1720 = vpow.pop %v1719
        %v1721 = vmul.f32 %v1644, 1.442695
        %v1722 = vpow.pop %v1721
        %v1723 = vmul.f32 %v1645, 1.442695
        %v1724 = vpow.pop %v1723
        %v1725 = vmul.f32 %v1646, 1.442695
        %v1726 = vpow.pop %v1725
        %v1727 = vmul.f32 %v1647, 1.442695
        %v1728 = vpow.pop %v1727
        %v1729 = vmul.f32 %v1648, 1.442695
        %v1730 = vpow.pop %v1729
        %v1731 = vmul.f32 %v1649, 1.442695
        %v1732 = vpow.pop %v1731
        %v1733 = vmul.f32 %v1650, 1.442695
        %v1734 = vpow.pop %v1733
        %v1735 = vmul.f32 %v1651, 1.442695
        %v1736 = vpow.pop %v1735
        %v1737 = vmul.f32 %v1652, 1.442695
        %v1738 = vpow.pop %v1737
        %v1739 = vmul.f32 %v1653, 1.442695
        %v1740 = vpow.pop %v1739
        %v1741 = vmul.f32 %v1654, 1.442695
        %v1742 = vpow.pop %v1741
        %v1743 = vmul.f32 %v1655, 1.442695
        %v1744 = vpow.pop %v1743
        %v1745 = vmul.f32 %v1656, 1.442695
        %v1746 = vpow.pop %v1745
        %v1747 = vmul.f32 %v1657, 1.442695
        %v1748 = vpow.pop %v1747
        %v1749 = vmul.f32 %v1658, 1.442695
        %v1750 = vpow.pop %v1749
        %v1751 = vmul.f32 %v1659, 1.442695
        %v1752 = vpow.pop %v1751
        %v1753 = vmul.f32 %v1660, 1.442695
        %v1754 = vpow.pop %v1753
        %v1755 = vmul.f32 %v1661, 1.442695
        %v1756 = vpow.pop %v1755
        %v1757 = vmul.f32 %v1662, 1.442695
        %v1758 = vpow.pop %v1757
        %v1759 = vmul.f32 %v1663, 1.442695
        %v1760 = vpow.pop %v1759
        %v1761 = vmul.f32 %v1664, 1.442695
        %v1762 = vpow.pop %v1761
        %v1763 = vmul.f32 %v1665, 1.442695
        %v1764 = vpow.pop %v1763
        %v1765 = vmul.f32 %v1666, 1.442695
        %v1766 = vpow.pop %v1765
        %v1767 = vmul.f32 %v1667, 1.442695
        %v1768 = vpow.pop %v1767
        %v1769 = vmul.f32 %v1668, 1.442695
        %v1770 = vpow.pop %v1769
        %v1771 = vmul.f32 %v1669, 1.442695
        %v1772 = vpow.pop %v1771
        %v1773 = vmul.f32 %v1670, 1.442695
        %v1774 = vpow.pop %v1773
        %v1775 = vmul.f32 %v1671, 1.442695
        %v1776 = vpow.pop %v1775
        %v1777 = vmul.f32 %v1672, 1.442695
        %v1778 = vpow.pop %v1777
        %v1779 = vmul.f32 %v1673, 1.442695
        %v1780 = vpow.pop %v1779
        %v1781 = vmul.f32 %v1674, 1.442695
        %v1782 = vpow.pop %v1781
        %v1783 = vmul.f32 %v1675, 1.442695
        %v1784 = vpow.pop %v1783
        %v1785 = vmul.f32 %v1676, 1.442695
        %v1786 = vpow.pop %v1785
        %v1787 = vmul.f32 %v1677, 1.442695
        %v1788 = vpow.pop %v1787
        %v1789 = vmul.f32 %v1678, 1.442695
        %v1790 = vpow.pop %v1789
        %v1791 = vmul.f32 %v1679, 1.442695
        %v1792 = vpow.pop %v1791
        %v1793 = vmul.f32 %v1680, 1.442695
        %v1794 = vpow.pop %v1793
        %v1795 = vmul.f32 %v1681, 1.442695
        %v1796 = vpow.pop %v1795
        %v1797 = vmul.f32 %v1682, 1.442695
        %v1798 = vpow.pop %v1797
        %v1799 = vmul.f32 %v1683, 1.442695
        %v1800 = vpow.pop %v1799
        %v1801 = vmul.f32 %v1684, 1.442695
        %v1802 = vpow.pop %v1801
        %v1803 = vmul.f32 %v1685, 1.442695
        %v1804 = vpow.pop %v1803
        %v1805 = vmul.f32 %v1686, 1.442695
        %v1806 = vpow.pop %v1805
        %v1807 = vmul.f32 %v1687, 1.442695
        %v1808 = vpow.pop %v1807
        %v1809 = vmul.f32 %v1688, 1.442695
        %v1810 = vpow.pop %v1809
        %v1811 = vmul.f32 %v1689, 1.442695
        %v1812 = vpow.pop %v1811
        %v1813 = vmul.f32 %v1690, 1.442695
        %v1814 = vpow.pop %v1813
        %v1815 = vmul.f32 %v1691, 1.442695
        %v1816 = vpow.pop %v1815
        %v1817 = vmul.f32 %v1692, 1.442695
        %v1818 = vpow.pop %v1817
        %v1819 = vmul.f32 %v1693, 1.442695
        %v1820 = vpow.pop %v1819
        %v1821 = vmul.f32 %v1694, 1.442695
        %v1822 = vpow.pop %v1821
        %v1823 = vadd.f32 %v1696, %v1698
        %v1824 = vadd.f32 %v1823, %v1700
        %v1825 = vadd.f32 %v1824, %v1702
        %v1826 = vadd.f32 %v1825, %v1704
        %v1827 = vadd.f32 %v1826, %v1706
        %v1828 = vadd.f32 %v1827, %v1708
        %v1829 = vadd.f32 %v1828, %v1710
        %v1830 = vadd.f32 %v1829, %v1712
        %v1831 = vadd.f32 %v1830, %v1714
        %v1832 = vadd.f32 %v1831, %v1716
        %v1833 = vadd.f32 %v1832, %v1718
        %v1834 = vadd.f32 %v1833, %v1720
        %v1835 = vadd.f32 %v1834, %v1722
        %v1836 = vadd.f32 %v1835, %v1724
        %v1837 = vadd.f32 %v1836, %v1726
        %v1838 = vrot.slane %v1837, 4
        %v1839 = vadd.f32 %v1837, %v1838
        %v1840 = vrot.slane %v1839, 2
        %v1841 = vadd.f32 %v1839, %v1840
        %v1842 = vrot.slane %v1841, 1
        %v1843 = vadd.f32 %v1841, %v1842
        %v1844 = vadd.f32 %v1728, %v1730
        %v1845 = vadd.f32 %v1844, %v1732
        %v1846 = vadd.f32 %v1845, %v1734
        %v1847 = vadd.f32 %v1846, %v1736
        %v1848 = vadd.f32 %v1847, %v1738
        %v1849 = vadd.f32 %v1848, %v1740
        %v1850 = vadd.f32 %v1849, %v1742
        %v1851 = vadd.f32 %v1850, %v1744
        %v1852 = vadd.f32 %v1851, %v1746
        %v1853 = vadd.f32 %v1852, %v1748
        %v1854 = vadd.f32 %v1853, %v1750
        %v1855 = vadd.f32 %v1854, %v1752
        %v1856 = vadd.f32 %v1855, %v1754
        %v1857 = vadd.f32 %v1856, %v1756
        %v1858 = vadd.f32 %v1857, %v1758
        %v1859 = vrot.slane %v1858, 4
        %v1860 = vadd.f32 %v1858, %v1859
        %v1861 = vrot.slane %v1860, 2
        %v1862 = vadd.f32 %v1860, %v1861
        %v1863 = vrot.slane %v1862, 1
        %v1864 = vadd.f32 %v1862, %v1863
        %v1865 = vadd.f32 %v1760, %v1762
        %v1866 = vadd.f32 %v1865, %v1764
        %v1867 = vadd.f32 %v1866, %v1766
        %v1868 = vadd.f32 %v1867, %v1768
        %v1869 = vadd.f32 %v1868, %v1770
        %v1870 = vadd.f32 %v1869, %v1772
        %v1871 = vadd.f32 %v1870, %v1774
        %v1872 = vadd.f32 %v1871, %v1776
        %v1873 = vadd.f32 %v1872, %v1778
        %v1874 = vadd.f32 %v1873, %v1780
        %v1875 = vadd.f32 %v1874, %v1782
        %v1876 = vadd.f32 %v1875, %v1784
        %v1877 = vadd.f32 %v1876, %v1786
        %v1878 = vadd.f32 %v1877, %v1788
        %v1879 = vadd.f32 %v1878, %v1790
        %v1880 = vrot.slane %v1879, 4
        %v1881 = vadd.f32 %v1879, %v1880
        %v1882 = vrot.slane %v1881, 2
        %v1883 = vadd.f32 %v1881, %v1882
        %v1884 = vrot.slane %v1883, 1
        %v1885 = vadd.f32 %v1883, %v1884
        %v1886 = vadd.f32 %v1792, %v1794
        %v1887 = vadd.f32 %v1886, %v1796
        %v1888 = vadd.f32 %v1887, %v1798
        %v1889 = vadd.f32 %v1888, %v1800
        %v1890 = vadd.f32 %v1889, %v1802
        %v1891 = vadd.f32 %v1890, %v1804
        %v1892 = vadd.f32 %v1891, %v1806
        %v1893 = vadd.f32 %v1892, %v1808
        %v1894 = vadd.f32 %v1893, %v1810
        %v1895 = vadd.f32 %v1894, %v1812
        %v1896 = vadd.f32 %v1895, %v1814
        %v1897 = vadd.f32 %v1896, %v1816
        %v1898 = vadd.f32 %v1897, %v1818
        %v1899 = vadd.f32 %v1898, %v1820
        %v1900 = vadd.f32 %v1899, %v1822
        %v1901 = vrot.slane %v1900, 4
        %v1902 = vadd.f32 %v1900, %v1901
        %v1903 = vrot.slane %v1902, 2
        %v1904 = vadd.f32 %v1902, %v1903
        %v1905 = vrot.slane %v1904, 1
        %v1906 = vadd.f32 %v1904, %v1905
        %v1907 = vrcp.pop %v1843
        %v1908 = vrcp.pop %v1864
        %v1909 = vrcp.pop %v1885
        %v1910 = vrcp.pop %v1906
        %v1911 = vmul.f32 %v1696, %v1907
        %v1912 = vmul.f32 %v1698, %v1907
        %v1913 = vmul.f32 %v1700, %v1907
        %v1914 = vmul.f32 %v1702, %v1907
        %v1915 = vmul.f32 %v1704, %v1907
        %v1916 = vmul.f32 %v1706, %v1907
        %v1917 = vmul.f32 %v1708, %v1907
        %v1918 = vmul.f32 %v1710, %v1907
        %v1919 = vmul.f32 %v1712, %v1907
        %v1920 = vmul.f32 %v1714, %v1907
        %v1921 = vmul.f32 %v1716, %v1907
        %v1922 = vmul.f32 %v1718, %v1907
        %v1923 = vmul.f32 %v1720, %v1907
        %v1924 = vmul.f32 %v1722, %v1907
        %v1925 = vmul.f32 %v1724, %v1907
        %v1926 = vmul.f32 %v1726, %v1907
        %v1927 = vmul.f32 %v1728, %v1908
        %v1928 = vmul.f32 %v1730, %v1908
        %v1929 = vmul.f32 %v1732, %v1908
        %v1930 = vmul.f32 %v1734, %v1908
        %v1931 = vmul.f32 %v1736, %v1908
        %v1932 = vmul.f32 %v1738, %v1908
        %v1933 = vmul.f32 %v1740, %v1908
        %v1934 = vmul.f32 %v1742, %v1908
        %v1935 = vmul.f32 %v1744, %v1908
        %v1936 = vmul.f32 %v1746, %v1908
        %v1937 = vmul.f32 %v1748, %v1908
        %v1938 = vmul.f32 %v1750, %v1908
        %v1939 = vmul.f32 %v1752, %v1908
        %v1940 = vmul.f32 %v1754, %v1908
        %v1941 = vmul.f32 %v1756, %v1908
        %v1942 = vmul.f32 %v1758, %v1908
        %v1943 = vmul.f32 %v1760, %v1909
        %v1944 = vmul.f32 %v1762, %v1909
        %v1945 = vmul.f32 %v1764, %v1909
        %v1946 = vmul.f32 %v1766, %v1909
        %v1947 = vmul.f32 %v1768, %v1909
        %v1948 = vmul.f32 %v1770, %v1909
        %v1949 = vmul.f32 %v1772, %v1909
        %v1950 = vmul.f32 %v1774, %v1909
        %v1951 = vmul.f32 %v1776, %v1909
        %v1952 = vmul.f32 %v1778, %v1909
        %v1953 = vmul.f32 %v1780, %v1909
        %v1954 = vmul.f32 %v1782, %v1909
        %v1955 = vmul.f32 %v1784, %v1909
        %v1956 = vmul.f32 %v1786, %v1909
        %v1957 = vmul.f32 %v1788, %v1909
        %v1958 = vmul.f32 %v1790, %v1909
        %v1959 = vmul.f32 %v1792, %v1910
        %v1960 = vmul.f32 %v1794, %v1910
        %v1961 = vmul.f32 %v1796, %v1910
        %v1962 = vmul.f32 %v1798, %v1910
        %v1963 = vmul.f32 %v1800, %v1910
        %v1964 = vmul.f32 %v1802, %v1910
        %v1965 = vmul.f32 %v1804, %v1910
        %v1966 = vmul.f32 %v1806, %v1910
        %v1967 = vmul.f32 %v1808, %v1910
        %v1968 = vmul.f32 %v1810, %v1910
        %v1969 = vmul.f32 %v1812, %v1910
        %v1970 = vmul.f32 %v1814, %v1910
        %v1971 = vmul.f32 %v1816, %v1910
        %v1972 = vmul.f32 %v1818, %v1910
        %v1973 = vmul.f32 %v1820, %v1910
        %v1974 = vmul.f32 %v1822, %v1910
        %v1975 = vpack.c.bf16 %v1912, %v1911
        %v1976 = vpack.c.bf16 %v1914, %v1913
        %v1977 = vpack.c.bf16 %v1916, %v1915
        %v1978 = vpack.c.bf16 %v1918, %v1917
        %v1979 = vpack.c.bf16 %v1920, %v1919
        %v1980 = vpack.c.bf16 %v1922, %v1921
        %v1981 = vpack.c.bf16 %v1924, %v1923
        %v1982 = vpack.c.bf16 %v1926, %v1925
        %v1983 = vpack.c.bf16 %v1928, %v1927
        %v1984 = vpack.c.bf16 %v1930, %v1929
        %v1985 = vpack.c.bf16 %v1932, %v1931
        %v1986 = vpack.c.bf16 %v1934, %v1933
        %v1987 = vpack.c.bf16 %v1936, %v1935
        %v1988 = vpack.c.bf16 %v1938, %v1937
        %v1989 = vpack.c.bf16 %v1940, %v1939
        %v1990 = vpack.c.bf16 %v1942, %v1941
        %v1991 = vpack.c.bf16 %v1944, %v1943
        %v1992 = vpack.c.bf16 %v1946, %v1945
        %v1993 = vpack.c.bf16 %v1948, %v1947
        %v1994 = vpack.c.bf16 %v1950, %v1949
        %v1995 = vpack.c.bf16 %v1952, %v1951
        %v1996 = vpack.c.bf16 %v1954, %v1953
        %v1997 = vpack.c.bf16 %v1956, %v1955
        %v1998 = vpack.c.bf16 %v1958, %v1957
        %v1999 = vpack.c.bf16 %v1960, %v1959
        %v2000 = vpack.c.bf16 %v1962, %v1961
        %v2001 = vpack.c.bf16 %v1964, %v1963
        %v2002 = vpack.c.bf16 %v1966, %v1965
        %v2003 = vpack.c.bf16 %v1968, %v1967
        %v2004 = vpack.c.bf16 %v1970, %v1969
        %v2005 = vpack.c.bf16 %v1972, %v1971
        %v2006 = vpack.c.bf16 %v1974, %v1973
        %2007 = vmatprep.subr.bf16.mxu0 0
        %2008 = vmatpush1.bf16.msra.mxu0 %v1975
        %2009 = vmatprep.subr.bf16.mxu0 0
        %2010 = vmatpush1.bf16.msra.mxu0 %v1976
        %2011 = vmatprep.subr.bf16.mxu0 0
        %2012 = vmatpush1.bf16.msra.mxu0 %v1977
        %2013 = vmatprep.subr.bf16.mxu0 0
        %2014 = vmatpush1.bf16.msra.mxu0 %v1978
        %2015 = vmatprep.subr.bf16.mxu0 0
        %2016 = vmatpush1.bf16.msra.mxu0 %v1979
        %2017 = vmatprep.subr.bf16.mxu0 0
        %2018 = vmatpush1.bf16.msra.mxu0 %v1980
        %2019 = vmatprep.subr.bf16.mxu0 0
        %2020 = vmatpush1.bf16.msra.mxu0 %v1981
        %2021 = vmatprep.subr.bf16.mxu0 0
        %2022 = vmatpush1.bf16.msra.mxu0 %v1982
        %2023 = vmatprep.subr.bf16.mxu0 0
        %2024 = vmatpush1.bf16.msra.mxu0 0
        %2025 = vmatprep.subr.bf16.mxu0 0
        %2026 = vmatpush1.bf16.msra.mxu0 0
        %2027 = vmatprep.subr.bf16.mxu0 0
        %2028 = vmatpush1.bf16.msra.mxu0 0
        %2029 = vmatprep.subr.bf16.mxu0 0
        %2030 = vmatpush1.bf16.msra.mxu0 0
        %2031 = vmatprep.subr.bf16.mxu0 0
        %2032 = vmatpush1.bf16.msra.mxu0 0
        %2033 = vmatprep.subr.bf16.mxu0 0
        %2034 = vmatpush1.bf16.msra.mxu0 0
        %2035 = vmatprep.subr.bf16.mxu0 0
        %2036 = vmatpush1.bf16.msra.mxu0 0
        %2037 = vmatprep.subr.bf16.mxu0 0
        %2038 = vmatpush1.bf16.msra.mxu0 0
        %2039 = vmatprep.mubr.bf16.mxu0 0
        %2040 = vmatmul.mubr.bf16.gmra.mrb[0].mxu0 %v994
        %v2041 = vpop.f32.mrb[0].mxu0
        %v2042 = vadd.f32 0.0, %v2041
        %v2043 = vpop.f32.mrb[0].mxu0
        %v2044 = vpop.f32.mrb[0].mxu0
        %v2045 = vadd.f32 0.0, %v2044
        %v2046 = vpop.f32.mrb[0].mxu0
        %2047 = vdwg.mxu0
        %2048 = vmatprep.subr.bf16.mxu0 0
        %2049 = vmatpush1.bf16.msra.mxu0 %v1983
        %2050 = vmatprep.subr.bf16.mxu0 0
        %2051 = vmatpush1.bf16.msra.mxu0 %v1984
        %2052 = vmatprep.subr.bf16.mxu0 0
        %2053 = vmatpush1.bf16.msra.mxu0 %v1985
        %2054 = vmatprep.subr.bf16.mxu0 0
        %2055 = vmatpush1.bf16.msra.mxu0 %v1986
        %2056 = vmatprep.subr.bf16.mxu0 0
        %2057 = vmatpush1.bf16.msra.mxu0 %v1987
        %2058 = vmatprep.subr.bf16.mxu0 0
        %2059 = vmatpush1.bf16.msra.mxu0 %v1988
        %2060 = vmatprep.subr.bf16.mxu0 0
        %2061 = vmatpush1.bf16.msra.mxu0 %v1989
        %2062 = vmatprep.subr.bf16.mxu0 0
        %2063 = vmatpush1.bf16.msra.mxu0 %v1990
        %2064 = vmatprep.subr.bf16.mxu0 0
        %2065 = vmatpush1.bf16.msra.mxu0 0
        %2066 = vmatprep.subr.bf16.mxu0 0
        %2067 = vmatpush1.bf16.msra.mxu0 0
        %2068 = vmatprep.subr.bf16.mxu0 0
        %2069 = vmatpush1.bf16.msra.mxu0 0
        %2070 = vmatprep.subr.bf16.mxu0 0
        %2071 = vmatpush1.bf16.msra.mxu0 0
        %2072 = vmatprep.subr.bf16.mxu0 0
        %2073 = vmatpush1.bf16.msra.mxu0 0
        %2074 = vmatprep.subr.bf16.mxu0 0
        %2075 = vmatpush1.bf16.msra.mxu0 0
        %2076 = vmatprep.subr.bf16.mxu0 0
        %2077 = vmatpush1.bf16.msra.mxu0 0
        %2078 = vmatprep.subr.bf16.mxu0 0
        %2079 = vmatpush1.bf16.msra.mxu0 0
        %2080 = vmatprep.mubr.bf16.mxu0 0
        %2081 = vmatmul.mubr.bf16.gmra.mrb[0].mxu0 %v995
        %v2082 = vpop.f32.mrb[0].mxu0
        %v2083 = vadd.f32 0.0, %v2082
        %v2084 = vpop.f32.mrb[0].mxu0
        %v2085 = vpop.f32.mrb[0].mxu0
        %v2086 = vadd.f32 0.0, %v2085
        %v2087 = vpop.f32.mrb[0].mxu0
        %2088 = vdwg.mxu0
        %2089 = vmatprep.subr.bf16.mxu0 0
        %2090 = vmatpush1.bf16.msra.mxu0 %v1991
        %2091 = vmatprep.subr.bf16.mxu0 0
        %2092 = vmatpush1.bf16.msra.mxu0 %v1992
        %2093 = vmatprep.subr.bf16.mxu0 0
        %2094 = vmatpush1.bf16.msra.mxu0 %v1993
        %2095 = vmatprep.subr.bf16.mxu0 0
        %2096 = vmatpush1.bf16.msra.mxu0 %v1994
        %2097 = vmatprep.subr.bf16.mxu0 0
        %2098 = vmatpush1.bf16.msra.mxu0 %v1995
        %2099 = vmatprep.subr.bf16.mxu0 0
        %2100 = vmatpush1.bf16.msra.mxu0 %v1996
        %2101 = vmatprep.subr.bf16.mxu0 0
        %2102 = vmatpush1.bf16.msra.mxu0 %v1997
        %2103 = vmatprep.subr.bf16.mxu0 0
        %2104 = vmatpush1.bf16.msra.mxu0 %v1998
        %2105 = vmatprep.subr.bf16.mxu0 0
        %2106 = vmatpush1.bf16.msra.mxu0 0
        %2107 = vmatprep.subr.bf16.mxu0 0
        %2108 = vmatpush1.bf16.msra.mxu0 0
        %2109 = vmatprep.subr.bf16.mxu0 0
        %2110 = vmatpush1.bf16.msra.mxu0 0
        %2111 = vmatprep.subr.bf16.mxu0 0
        %2112 = vmatpush1.bf16.msra.mxu0 0
        %2113 = vmatprep.subr.bf16.mxu0 0
        %2114 = vmatpush1.bf16.msra.mxu0 0
        %2115 = vmatprep.subr.bf16.mxu0 0
        %2116 = vmatpush1.bf16.msra.mxu0 0
        %2117 = vmatprep.subr.bf16.mxu0 0
        %2118 = vmatpush1.bf16.msra.mxu0 0
        %2119 = vmatprep.subr.bf16.mxu0 0
        %2120 = vmatpush1.bf16.msra.mxu0 0
        %2121 = vmatprep.mubr.bf16.mxu0 0
        %2122 = vmatmul.mubr.bf16.gmra.mrb[0].mxu0 %v996
        %v2123 = vpop.f32.mrb[0].mxu0
        %v2124 = vadd.f32 0.0, %v2123
        %v2125 = vpop.f32.mrb[0].mxu0
        %v2126 = vpop.f32.mrb[0].mxu0
        %v2127 = vadd.f32 0.0, %v2126
        %v2128 = vpop.f32.mrb[0].mxu0
        %2129 = vdwg.mxu0
        %2130 = vmatprep.subr.bf16.mxu0 0
        %2131 = vmatpush1.bf16.msra.mxu0 %v1999
        %2132 = vmatprep.subr.bf16.mxu0 0
        %2133 = vmatpush1.bf16.msra.mxu0 %v2000
        %2134 = vmatprep.subr.bf16.mxu0 0
        %2135 = vmatpush1.bf16.msra.mxu0 %v2001
        %2136 = vmatprep.subr.bf16.mxu0 0
        %2137 = vmatpush1.bf16.msra.mxu0 %v2002
        %2138 = vmatprep.subr.bf16.mxu0 0
        %2139 = vmatpush1.bf16.msra.mxu0 %v2003
        %2140 = vmatprep.subr.bf16.mxu0 0
        %2141 = vmatpush1.bf16.msra.mxu0 %v2004
        %2142 = vmatprep.subr.bf16.mxu0 0
        %2143 = vmatpush1.bf16.msra.mxu0 %v2005
        %2144 = vmatprep.subr.bf16.mxu0 0
        %2145 = vmatpush1.bf16.msra.mxu0 %v2006
        %2146 = vmatprep.subr.bf16.mxu0 0
        %2147 = vmatpush1.bf16.msra.mxu0 0
        %2148 = vmatprep.subr.bf16.mxu0 0
        %2149 = vmatpush1.bf16.msra.mxu0 0
        %2150 = vmatprep.subr.bf16.mxu0 0
        %2151 = vmatpush1.bf16.msra.mxu0 0
        %2152 = vmatprep.subr.bf16.mxu0 0
        %2153 = vmatpush1.bf16.msra.mxu0 0
        %2154 = vmatprep.subr.bf16.mxu0 0
        %2155 = vmatpush1.bf16.msra.mxu0 0
        %2156 = vmatprep.subr.bf16.mxu0 0
        %2157 = vmatpush1.bf16.msra.mxu0 0
        %2158 = vmatprep.subr.bf16.mxu0 0
        %2159 = vmatpush1.bf16.msra.mxu0 0
        %2160 = vmatprep.subr.bf16.mxu0 0
        %2161 = vmatpush1.bf16.msra.mxu0 0
        %2162 = vmatprep.mubr.bf16.mxu0 0
        %2163 = vmatmul.mubr.bf16.gmra.mrb[0].mxu0 %v997
        %v2164 = vpop.f32.mrb[0].mxu0
        %v2165 = vadd.f32 0.0, %v2164
        %v2166 = vpop.f32.mrb[0].mxu0
        %v2167 = vpop.f32.mrb[0].mxu0
        %v2168 = vadd.f32 0.0, %v2167
        %v2169 = vpop.f32.mrb[0].mxu0
        %2170 = vdwg.mxu0
        %v2171 = vpack.c.bf16 %v2045, %v2042
        %v2172 = vpack.c.bf16 %v2086, %v2083
        %v2173 = vpack.c.bf16 %v2127, %v2124
        %v2174 = vpack.c.bf16 %v2168, %v2165
        %v2175 = vld [vmem:[%s9] sm:$0xf]
        %v2176 = vld [vmem:[%s9 + $0x4] sm:$0xf]
        %v2177 = vld [vmem:[%s9 + $0x8] sm:$0xf]
        %v2178 = vld [vmem:[%s9 + $0xc] sm:$0xf]
        %v2179 = vld [vmem:[%s9 + $0x10] sm:$0xf]
        %v2180 = vld [vmem:[%s9 + $0x14] sm:$0xf]
        %v2181 = vld [vmem:[%s9 + $0x18] sm:$0xf]
        %v2182 = vld [vmem:[%s9 + $0x1c] sm:$0xf]
        %v2183 = vld [vmem:[%s10] sm:$0xff]
        %v2184 = vld [vmem:[%s10 + $0x8] sm:$0xff]
        %v2185 = vld [vmem:[%s10 + $0x10] sm:$0xff]
        %v2186 = vld [vmem:[%s10 + $0x18] sm:$0xff]
        %v2187 = vld [vmem:[%s10 + $0x20] sm:$0xff]
        %v2188 = vld [vmem:[%s10 + $0x28] sm:$0xff]
        %v2189 = vld [vmem:[%s10 + $0x30] sm:$0xff]
        %v2190 = vld [vmem:[%s10 + $0x38] sm:$0xff]
        %2192 = vset.pattern.permute.xlu0 0
        %2193 = vperm.xlu0 %2192, %v2183
        %v2194 = vpop.permute.xlu0 %2193
        %2197 = vset.pattern.permute.xlu0 0
        %2198 = vperm.xlu0 %2197, %v2184
        %v2199 = vpop.permute.xlu0 %2198
        %2202 = vset.pattern.permute.xlu0 0
        %2203 = vperm.xlu0 %2202, %v2185
        %v2204 = vpop.permute.xlu0 %2203
        %2207 = vset.pattern.permute.xlu0 0
        %2208 = vperm.xlu0 %2207, %v2186
        %v2209 = vpop.permute.xlu0 %2208
        %2212 = vset.pattern.permute.xlu0 0
        %2213 = vperm.xlu0 %2212, %v2187
        %v2214 = vpop.permute.xlu0 %2213
        %2217 = vset.pattern.permute.xlu0 0
        %2218 = vperm.xlu0 %2217, %v2188
        %v2219 = vpop.permute.xlu0 %2218
        %2222 = vset.pattern.permute.xlu0 0
        %2223 = vperm.xlu0 %2222, %v2189
        %v2224 = vpop.permute.xlu0 %2223
        %2227 = vset.pattern.permute.xlu0 0
        %2228 = vperm.xlu0 %2227, %v2190
        %v2229 = vpop.permute.xlu0 %2228
        %v2239 = vunpack.c.l.b16 %v2175
        %v2240 = vunpack.c.l.b16 %v2176
        %v2241 = vunpack.c.l.b16 %v2177
        %v2242 = vunpack.c.l.b16 %v2178
        %v2243 = vunpack.c.l.b16 %v2179
        %v2244 = vunpack.c.l.b16 %v2180
        %v2245 = vunpack.c.l.b16 %v2181
        %v2246 = vunpack.c.l.b16 %v2182
        %v2247 = vpack.c.b16 %v2240, %v2239
        %v2248 = vpack.c.b16 %v2242, %v2241
        %v2249 = vpack.c.b16 %v2244, %v2243
        %v2250 = vpack.c.b16 %v2246, %v2245
        %v2252 = vsel %vm578, %v2247, 0
        %v2255 = vsel %vm578, %v2248, 0
        %v2258 = vsel %vm578, %v2249, 0
        %v2261 = vsel %vm578, %v2250, 0
        %2263 = vmatprep.subr.bf16.mxu0 0
        %2264 = vmatpush1.bf16.msra.mxu0 %v2171
        %2265 = vmatprep.subr.bf16.mxu0 0
        %2266 = vmatpush1.bf16.msra.mxu0 %v2172
        %2267 = vmatprep.subr.bf16.mxu0 0
        %2268 = vmatpush1.bf16.msra.mxu0 %v2173
        %2269 = vmatprep.subr.bf16.mxu0 0
        %2270 = vmatpush1.bf16.msra.mxu0 %v2174
        %2271 = vmatprep.subr.bf16.mxu0 0
        %2272 = vmatpush1.bf16.msra.mxu0 0
        %2273 = vmatprep.subr.bf16.mxu0 0
        %2274 = vmatpush1.bf16.msra.mxu0 0
        %2275 = vmatprep.subr.bf16.mxu0 0
        %2276 = vmatpush1.bf16.msra.mxu0 0
        %2277 = vmatprep.subr.bf16.mxu0 0
        %2278 = vmatpush1.bf16.msra.mxu0 0
        %2279 = vmatprep.subr.bf16.mxu0 0
        %2280 = vmatpush1.bf16.msra.mxu0 0
        %2281 = vmatprep.subr.bf16.mxu0 0
        %2282 = vmatpush1.bf16.msra.mxu0 0
        %2283 = vmatprep.subr.bf16.mxu0 0
        %2284 = vmatpush1.bf16.msra.mxu0 0
        %2285 = vmatprep.subr.bf16.mxu0 0
        %2286 = vmatpush1.bf16.msra.mxu0 0
        %2287 = vmatprep.subr.bf16.mxu0 0
        %2288 = vmatpush1.bf16.msra.mxu0 0
        %2289 = vmatprep.subr.bf16.mxu0 0
        %2290 = vmatpush1.bf16.msra.mxu0 0
        %2291 = vmatprep.subr.bf16.mxu0 0
        %2292 = vmatpush1.bf16.msra.mxu0 0
        %2293 = vmatprep.subr.bf16.mxu0 0
        %2294 = vmatpush1.bf16.msra.mxu0 0
        %2295 = vmatprep.mubr.bf16.mxu0 0
        %2296 = vmatmul.mubr.bf16.gmra.mrb[0].mxu0 %v2252
        %v2297 = vpop.f32.mrb[0].mxu0
        %v2298 = vadd.f32 %v2194, %v2297
        %v2299 = vpop.f32.mrb[0].mxu0
        %v2300 = vpop.f32.mrb[0].mxu0
        %v2301 = vadd.f32 %v2199, %v2300
        %v2302 = vpop.f32.mrb[0].mxu0
        %2303 = vmatprep.mubr.bf16.mxu0 0
        %2304 = vmatmul.mubr.bf16.gmra.mrb[0].mxu0 %v2255
        %v2305 = vpop.f32.mrb[0].mxu0
        %v2306 = vadd.f32 %v2204, %v2305
        %v2307 = vpop.f32.mrb[0].mxu0
        %v2308 = vpop.f32.mrb[0].mxu0
        %v2309 = vadd.f32 %v2209, %v2308
        %v2310 = vpop.f32.mrb[0].mxu0
        %2311 = vmatprep.mubr.bf16.mxu0 0
        %2312 = vmatmul.mubr.bf16.gmra.mrb[0].mxu0 %v2258
        %v2313 = vpop.f32.mrb[0].mxu0
        %v2314 = vadd.f32 %v2214, %v2313
        %v2315 = vpop.f32.mrb[0].mxu0
        %v2316 = vpop.f32.mrb[0].mxu0
        %v2317 = vadd.f32 %v2219, %v2316
        %v2318 = vpop.f32.mrb[0].mxu0
        %2319 = vmatprep.mubr.bf16.mxu0 0
        %2320 = vmatmul.mubr.bf16.gmra.mrb[0].mxu0 %v2261
        %v2321 = vpop.f32.mrb[0].mxu0
        %v2322 = vadd.f32 %v2224, %v2321
        %v2323 = vpop.f32.mrb[0].mxu0
        %v2324 = vpop.f32.mrb[0].mxu0
        %v2325 = vadd.f32 %v2229, %v2324
        %v2326 = vpop.f32.mrb[0].mxu0
        %2327 = vdwg.mxu0
        %2328 = vst [vmem:[%s478] sm:$0xff] %v2298
        %2329 = vst [vmem:[%s478 + $0x8] sm:$0xff] %v2301
        %2330 = vst [vmem:[%s478 + $0x10] sm:$0xff] %v2306
        %2331 = vst [vmem:[%s478 + $0x18] sm:$0xff] %v2309
        %2332 = vst [vmem:[%s478 + $0x20] sm:$0xff] %v2314
        %2333 = vst [vmem:[%s478 + $0x28] sm:$0xff] %v2317
        %2334 = vst [vmem:[%s478 + $0x30] sm:$0xff] %v2322
        %2335 = vst [vmem:[%s478 + $0x38] sm:$0xff] %v2325
        %s2336 = sand.u32 %s284, 1
        %s2337 = scalar_lea.sflag [#allocation4], %s2336
        %s2338 = sand.u32 %s284, 1
        %s2339 = smul.addr %s2338, 64
        %s2340 = scalar_lea.vmem [#allocation10], %s2339
        // Predicated region
        $region81: #{tpu_custom_call.1} parent=63 // pred_check
          %p2341 = pneg %p294
        $region82: #{tpu_custom_call.1} parent=63 // pred_check_branch
          %2343 = sbr.rel (%p2341) target = $region84
        $region83: #{tpu_custom_call.1} parent=63 // pred_region
          %s2345 = ssub.s32 1024, 1024
          %2346 = vsyncadd %s2337, %s2345
          %s2347 = smul.addr %s30, 8
          %s2348 = smul.addr %s2347, 128
          %s2349 = scalar_lea.hbm %s11, %s2348
          %s2350 = sshll.u32 %s2340, 4
          %s2351 = int_to_ptr.vmem [resolvable:$true] %s2350
          %2356 = dma.vmem_to_hbm [thread:$0]  %s2351, 1024, %s2349, %s2337, 128, 128, 8
        $region84: #{tpu_custom_call.1} parent=63 // pred_fallthru
          _
      $region64: #{tpu_custom_call.1} parent=5 // pred_fallthru
        _
      %p2357 = scmp.le.s32.totalorder 2, %s25
      // Predicated region
      $region85: #{tpu_custom_call.1} parent=5 // pred_check
        %p2358 = pneg %p2357
      $region86: #{tpu_custom_call.1} parent=5 // pred_check_branch
        %2360 = sbr.rel (%p2358) target = $region88
      $region87: #{tpu_custom_call.1} parent=5 // pred_region
        %s2361 = ssub.s32 %s25, 2
        // Predicated region
        $region89: #{tpu_custom_call.1} parent=87 // pred_check
          %p2362 = pneg %p300
        $region90: #{tpu_custom_call.1} parent=87 // pred_check_branch
          %2364 = sbr.rel (%p2362) target = $region92
        $region91: #{tpu_custom_call.1} parent=87 // pred_region
          %s2365 = sand.u32 %s285, 1
          %s2366 = scalar_lea.sflag [#allocation4], %s2365
          %s2367 = sand.u32 %s285, 1
          %s2368 = smul.addr %s2367, 64
          %s2369 = scalar_lea.vmem [#allocation10], %s2368
          %2370 = dma.done %s2366, 1024
        $region92: #{tpu_custom_call.1} parent=87 // pred_fallthru
          _
      $region88: #{tpu_custom_call.1} parent=5 // pred_fallthru
        _
    $region6: #{tpu_custom_call.1} parent=1 // loop_footer
      %s29 = sadd.s32 1, %s25
    $region7: #{tpu_custom_call.1} parent=1 // loop_footer_branch
      %24 = sbr.rel target = $region3
    $region8: #{tpu_custom_call.1} parent=1 // loop_exit
      _
    %2371 = vsyncpa [#allocation3], 1
    %s2372 = scalar_lea.sflag [#allocation3], 1
    %2373 = vsyncpa %s2372, 1
    %2374 = vsyncpa [#allocation6], 1
    %2375 = vsyncpa [#allocation9], 1
    %2376 = vsyncpa [#allocation4], 1
    %s2377 = scalar_lea.sflag [#allocation4], 1
    %2378 = vsyncpa %s2377, 1

</llo_original>
